<compile_context>
chip_gen: v7x
topology: tpu7x:2x2x1
jax: 0.10.0
libtpu: 0.0.40
codegen_flags: <defaults>
</compile_context>

<pallas_src>
import functools
import math

import jax
import jax.numpy as jnp
from jax.experimental import pallas as pl
from jax.experimental.pallas import tpu as pltpu


def _layer_norm(z, gamma, beta, eps=1e-5):
    mu = jnp.mean(z, axis=-1, keepdims=True)
    var = jnp.mean((z - mu) ** 2, axis=-1, keepdims=True)
    return (z - mu) * jax.lax.rsqrt(var + eps) * gamma + beta


def _gelu(x):
    # TODO(synk): PyTorch nn.GELU default is exact (erf); the tanh approximation
    # is used for guaranteed Mosaic lowering (max abs deviation ~1e-3).
    c = 0.7978845608028654  # sqrt(2/pi)
    return 0.5 * x * (1.0 + jnp.tanh(c * (x + 0.044715 * x * x * x)))


def _mm(a, w):
    """MXU matmul with f32 accumulation.

    Activations are cast to the weight dtype so bf16 weights (recommended on
    v6e/v7x to halve HBM traffic / VMEM residency) hit the native bf16 MXU
    path; accumulation stays in f32 via preferred_element_type.
    """
    return jnp.dot(a.astype(w.dtype), w, preferred_element_type=jnp.float32)


def encoder_kernel(
    x_ref,
    wqkv_ref, bqkv_ref, wo_ref, bo_ref,
    ln1_g_ref, ln1_b_ref,
    w1_ref, b1_ref, w2_ref, b2_ref,
    ln2_g_ref, ln2_b_ref,
    out_ref,
    *, num_heads, temperature,
):
    """One grid step = (one batch tile) x (one encoder layer)."""
    layer = pl.program_id(1)

    # Initialize the resident residual stream from the input at the first layer.
    @pl.when(layer == 0)
    def _():
        out_ref[...] = x_ref[...]

    x3 = out_ref[...].astype(jnp.float32)            # [bt, S, D] residual stream
    bt, S, D = x3.shape
    H = num_heads
    dh = D // H
    T = bt * S
    scale = 1.0 / (math.sqrt(dh) * float(temperature))

    x2 = x3.reshape(T, D)                            # fat M dim for projections

    # ---------------- multi-head self-attention (heads batched) -------------
    # Fused QKV projection: one [T, D] x [D, 3D] matmul, then static lane splits.
    qkv = _mm(x2, wqkv_ref[0]) + bqkv_ref[0].astype(jnp.float32)   # [T, 3D]
    q = qkv[:, 0 * D:1 * D]
    k = qkv[:, 1 * D:2 * D]
    v = qkv[:, 2 * D:3 * D]

    def to_groups(t):
        # [T, D] -> [H*bt, S, dh]; group index g = h*bt + b (leading-axis concat
        # of static lane slices -- no minor-dim transpose required).
        t3 = t.reshape(bt, S, D)
        return jnp.concatenate(
            [t3[:, :, h * dh:(h + 1) * dh] for h in range(H)], axis=0)

    qg = to_groups(q)
    kg = to_groups(k)
    vg = to_groups(v)

    # Batched scores over all (head, batch) groups; contraction on the last dim
    # of both operands (no materialized kh.T).
    # TODO(synk): for long sequences, stream K/V blocks with an online softmax
    # instead of materializing the full [S, S] score matrix per group.
    s = jnp.einsum("gqd,gkd->gqk", qg, kg,
                   preferred_element_type=jnp.float32) * scale        # [H*bt,S,S]
    s = s - jnp.max(s, axis=-1, keepdims=True)
    p = jnp.exp(s)
    # EUP approximate reciprocal instead of a VPU divide.
    p = p * pl.reciprocal(jnp.sum(p, axis=-1, keepdims=True), approx=True)
    og = jnp.einsum("gqk,gkd->gqd", p, vg,
                    preferred_element_type=jnp.float32)               # [H*bt,S,dh]

    # Regroup heads on the lane axis: ctx[b, s, h*dh:(h+1)*dh] = og[h*bt+b, s, :]
    # (XLU-only relayout), then ONE full-K output projection on the MXU.
    ctx = jnp.concatenate(
        [og[h * bt:(h + 1) * bt] for h in range(H)], axis=-1)         # [bt,S,D]
    attn = _mm(ctx.reshape(T, D), wo_ref[0]) + bo_ref[0].astype(jnp.float32)

    y = _layer_norm(x2 + attn,
                    ln1_g_ref[0].astype(jnp.float32),
                    ln1_b_ref[0].astype(jnp.float32))

    # ---------------- feed-forward -------------------------------------------
    h1 = _gelu(_mm(y, w1_ref[0]) + b1_ref[0].astype(jnp.float32))     # [T, F]
    f = _mm(h1, w2_ref[0]) + b2_ref[0].astype(jnp.float32)            # [T, D]

    z = _layer_norm(y + f,
                    ln2_g_ref[0].astype(jnp.float32),
                    ln2_b_ref[0].astype(jnp.float32))

    out_ref[...] = z.reshape(bt, S, D).astype(out_ref.dtype)


# Stacked (leading layer axis L) parameter order fed to the kernel.
_PARAM_ORDER = ("wqkv", "bqkv", "wo", "bo",
                "ln1_g", "ln1_b", "w1", "b1", "w2", "b2", "ln2_g", "ln2_b")


def transformer_encoder(x, params, *, num_heads, temperature=1, batch_block=None):
    """Fused multi-layer encoder forward.  `params` holds layer-stacked arrays."""
    B, S, D = x.shape
    assert D % num_heads == 0
    L = params["wqkv"].shape[0]
    F = params["w1"].shape[-1]

    bt = B if batch_block is None else batch_block
    assert B % bt == 0

    kernel = functools.partial(
        encoder_kernel, num_heads=num_heads, temperature=temperature)

    in_specs = [pl.BlockSpec((bt, S, D), lambda b, l: (b, 0, 0))]
    args = [x]
    for name in _PARAM_ORDER:
        w = params[name]
        args.append(w)
        in_specs.append(
            pl.BlockSpec((1,) + w.shape[1:],
                         lambda b, l, nd=w.ndim - 1: (l,) + (0,) * nd))

    out_spec = pl.BlockSpec((bt, S, D), lambda b, l: (b, 0, 0))

    # Advisory cost estimate so XLA schedules surrounding ops well.
    flops = L * (2 * B * S * D * 3 * D      # fused QKV
                 + 2 * B * S * D * D        # output projection
                 + 4 * B * S * S * D        # scores + PV
                 + 4 * B * S * D * F)       # FFN
    transcendentals = L * (B * num_heads * S * S + B * S * F)
    bytes_accessed = (2 * x.size * x.dtype.itemsize
                      + sum(int(p.size) * p.dtype.itemsize for p in params.values()))

    # VMEM budget: per-layer weights are double-buffered (prefetch of layer l+1)
    # plus the resident activation block.  Clamped below v7x's 64 MiB physical
    # VMEM; large configs should use bf16 weights and/or K-tile the FFN.
    total_w = sum(int(p.size) * p.dtype.itemsize for p in params.values())
    per_layer_w = total_w // max(L, 1)
    act_block = bt * S * D * x.dtype.itemsize
    vmem_limit = int(min(max(2 * per_layer_w + 8 * act_block + (8 << 20), 32 << 20),
                         56 << 20))

    return pl.pallas_call(
        kernel,
        out_shape=jax.ShapeDtypeStruct((B, S, D), x.dtype),
        grid=(B // bt, L),
        in_specs=in_specs,
        out_specs=out_spec,
        compiler_params=pltpu.CompilerParams(
            dimension_semantics=("parallel", "arbitrary"),
            vmem_limit_bytes=vmem_limit,
        ),
        cost_estimate=pl.CostEstimate(
            flops=int(flops),
            transcendentals=int(transcendentals),
            bytes_accessed=int(bytes_accessed),
        ),
    )(*args)


def init_encoder_params(key, num_layers, hidden_dim, ffn_hidden_dim, num_heads,
                        param_dtype=jnp.float32):
    """Layer-stacked parameters.  Q/K/V weights are stored fused ([L, D, 3D])
    so the kernel runs a single QKV matmul.  Pass param_dtype=jnp.bfloat16 on
    v6e/v7x to halve weight residency / HBM traffic."""
    L, D, F = num_layers, hidden_dim, ffn_hidden_dim
    ks = jax.random.split(key, 10)
    s = 0.02

    def w(k, shape, scl=s):
        return (scl * jax.random.normal(k, shape, jnp.float32)).astype(param_dtype)

    return {
        "wqkv": w(ks[0], (L, D, 3 * D)),
        "bqkv": s * jax.random.normal(ks[1], (L, 1, 3 * D), jnp.float32),
        "wo": w(ks[2], (L, D, D)),
        "bo": s * jax.random.normal(ks[3], (L, 1, D), jnp.float32),
        "ln1_g": 1.0 + 0.1 * jax.random.normal(ks[4], (L, 1, D), jnp.float32),
        "ln1_b": 0.1 * jax.random.normal(ks[5], (L, 1, D), jnp.float32),
        "w1": w(ks[6], (L, D, F)),
        "b1": s * jax.random.normal(ks[7], (L, 1, F), jnp.float32),
        "w2": w(ks[8], (L, F, D)),
        "b2": s * jax.random.normal(ks[9], (L, 1, D), jnp.float32),
        "ln2_g": jnp.ones((L, 1, D), jnp.float32),
        "ln2_b": jnp.zeros((L, 1, D), jnp.float32),
    }


def reference_encoder(x, params, *, num_heads, temperature=1):
    """Pure-JAX reference (same math, exact softmax divide) for validation."""
    L = params["wqkv"].shape[0]
    B, S, D = x.shape
    H = num_heads
    dh = D // H
    out = x.astype(jnp.float32)
    for l in range(L):
        x2 = out.reshape(B * S, D)
        qkv = x2 @ params["wqkv"][l].astype(jnp.float32) + params["bqkv"][l]
        q, k, v = qkv[:, :D], qkv[:, D:2 * D], qkv[:, 2 * D:]

        def heads(t):
            return t.reshape(B, S, H, dh).transpose(0, 2, 1, 3)  # [B,H,S,dh]

        qh, kh, vh = heads(q), heads(k), heads(v)
        s = jnp.einsum("bhqd,bhkd->bhqk", qh, kh) / (math.sqrt(dh) * temperature)
        p = jax.nn.softmax(s, axis=-1)
        o = jnp.einsum("bhqk,bhkd->bhqd", p, vh)
        ctx = o.transpose(0, 2, 1, 3).reshape(B * S, D)
        attn = ctx @ params["wo"][l].astype(jnp.float32) + params["bo"][l]
        y = _layer_norm(x2 + attn, params["ln1_g"][l], params["ln1_b"][l])
        h1 = _gelu(y @ params["w1"][l].astype(jnp.float32) + params["b1"][l])
        f = h1 @ params["w2"][l].astype(jnp.float32) + params["b2"][l]
        z = _layer_norm(y + f, params["ln2_g"][l], params["ln2_b"][l])
        out = z.reshape(B, S, D)
    return out


if __name__ == "__main__":
    # Small shapes consistent with the module (input_dim == hidden_dim so the
    # residual stream stacks across layers); S is a multiple of 8 (sublane).
    B, S = 2, 8
    hidden_dim = 32
    ffn_hidden_dim = 64
    num_heads = 4
    num_layers = 2
    temperature = 1

    root = jax.random.PRNGKey(0)
    k_x, k_p = jax.random.split(root)
    x = jax.random.normal(k_x, (B, S, hidden_dim), jnp.float32)
    params = init_encoder_params(
        k_p, num_layers, hidden_dim, ffn_hidden_dim, num_heads,
        param_dtype=jnp.float32)

    out = transformer_encoder(
        x, params, num_heads=num_heads, temperature=temperature)
    jax.block_until_ready(out)
    assert out.shape == (B, S, hidden_dim)

    ref = reference_encoder(x, params, num_heads=num_heads,
                            temperature=temperature)
    max_err = float(jnp.max(jnp.abs(out.astype(jnp.float32) - ref)))
    assert max_err < 5e-2, f"max abs error vs reference: {max_err}"
    print("KERNEL_OK")
</pallas_src>

<mosaic_0001>
module attributes {stable_mosaic.version = 11 : i64} {
  func.func @encoder_kernel(%arg0: i32, %arg1: i32, %arg2: memref<2x8x32xf32, #tpu.memory_space<vmem>>, %arg3: memref<1x32x96xf32, #tpu.memory_space<vmem>>, %arg4: memref<1x1x96xf32, #tpu.memory_space<vmem>>, %arg5: memref<1x32x32xf32, #tpu.memory_space<vmem>>, %arg6: memref<1x1x32xf32, #tpu.memory_space<vmem>>, %arg7: memref<1x1x32xf32, #tpu.memory_space<vmem>>, %arg8: memref<1x1x32xf32, #tpu.memory_space<vmem>>, %arg9: memref<1x32x64xf32, #tpu.memory_space<vmem>>, %arg10: memref<1x1x64xf32, #tpu.memory_space<vmem>>, %arg11: memref<1x64x32xf32, #tpu.memory_space<vmem>>, %arg12: memref<1x1x32xf32, #tpu.memory_space<vmem>>, %arg13: memref<1x1x32xf32, #tpu.memory_space<vmem>>, %arg14: memref<1x1x32xf32, #tpu.memory_space<vmem>>, %arg15: memref<2x8x32xf32, #tpu.memory_space<vmem>>) attributes {dimension_semantics = [#tpu.dimension_semantics<parallel>, #tpu.dimension_semantics<arbitrary>], iteration_bounds = array<i64: 1, 2>, scalar_prefetch = 0 : i64, scratch_operands = 0 : i64, tpu.core_type = #tpu.core_type<tc>, window_params = [{transform_indices = @transform_0, window_bounds = array<i64: 2, 8, 32>}, {transform_indices = @transform_1, window_bounds = array<i64: 1, 32, 96>}, {transform_indices = @transform_2, window_bounds = array<i64: 1, 1, 96>}, {transform_indices = @transform_3, window_bounds = array<i64: 1, 32, 32>}, {transform_indices = @transform_4, window_bounds = array<i64: 1, 1, 32>}, {transform_indices = @transform_5, window_bounds = array<i64: 1, 1, 32>}, {transform_indices = @transform_6, window_bounds = array<i64: 1, 1, 32>}, {transform_indices = @transform_7, window_bounds = array<i64: 1, 32, 64>}, {transform_indices = @transform_8, window_bounds = array<i64: 1, 1, 64>}, {transform_indices = @transform_9, window_bounds = array<i64: 1, 64, 32>}, {transform_indices = @transform_10, window_bounds = array<i64: 1, 1, 32>}, {transform_indices = @transform_11, window_bounds = array<i64: 1, 1, 32>}, {transform_indices = @transform_12, window_bounds = array<i64: 1, 1, 32>}, {transform_indices = @transform_13, window_bounds = array<i64: 2, 8, 32>}]} {
    %c0_i32 = arith.constant 0 : i32
    %0 = arith.cmpi eq, %arg1, %c0_i32 : i32
    %1 = arith.extui %0 : i1 to i32
    %c0_i32_0 = arith.constant 0 : i32
    %2 = arith.cmpi ne, %1, %c0_i32_0 : i32
    scf.if %2 {
      %c0_64 = arith.constant 0 : index
      %c0_65 = arith.constant 0 : index
      %c0_66 = arith.constant 0 : index
      %143 = vector.load %arg2[%c0_64, %c0_65, %c0_66] : memref<2x8x32xf32, #tpu.memory_space<vmem>>, vector<2x8x32xf32>
      %c0_67 = arith.constant 0 : index
      %c0_68 = arith.constant 0 : index
      %c0_69 = arith.constant 0 : index
      %144 = vector.load %arg15[%c0_67, %c0_68, %c0_69] : memref<2x8x32xf32, #tpu.memory_space<vmem>>, vector<2x8x32xf32>
      tpu.vector_store %arg15[%c0_67, %c0_68, %c0_69], %143 {strides = array<i32>} : memref<2x8x32xf32, #tpu.memory_space<vmem>>, vector<2x8x32xf32>,
    } else {
    }
    %c0 = arith.constant 0 : index
    %c0_1 = arith.constant 0 : index
    %c0_2 = arith.constant 0 : index
    %3 = vector.load %arg15[%c0, %c0_1, %c0_2] : memref<2x8x32xf32, #tpu.memory_space<vmem>>, vector<2x8x32xf32>
    %4 = vector.shape_cast %3 : vector<2x8x32xf32> to vector<16x32xf32>
    %c0_3 = arith.constant 0 : index
    %c0_4 = arith.constant 0 : index
    %c0_5 = arith.constant 0 : index
    %5 = vector.load %arg3[%c0_3, %c0_4, %c0_5] : memref<1x32x96xf32, #tpu.memory_space<vmem>>, vector<1x32x96xf32>
    %6 = vector.shape_cast %5 : vector<1x32x96xf32> to vector<32x96xf32>
    %cst = arith.constant dense<0.000000e+00> : vector<16x96xf32>
    %7 = tpu.matmul %4, %6, %cst {dimension_numbers = #tpu.dot_dimension_numbers<[1], [0], [0], [1], [0, 0, 1, 1], [], []>} : vector<16x32xf32>, vector<32x96xf32>, vector<16x96xf32> -> vector<16x96xf32>
    %c0_6 = arith.constant 0 : index
    %c0_7 = arith.constant 0 : index
    %c0_8 = arith.constant 0 : index
    %8 = vector.load %arg4[%c0_6, %c0_7, %c0_8] : memref<1x1x96xf32, #tpu.memory_space<vmem>>, vector<1x1x96xf32>
    %9 = vector.shape_cast %8 : vector<1x1x96xf32> to vector<1x96xf32>
    %10 = vector.broadcast %9 : vector<1x96xf32> to vector<16x96xf32>
    %11 = arith.addf %7, %10 : vector<16x96xf32>
    %12 = vector.extract_strided_slice %11 {offsets = [0, 0], sizes = [16, 32], strides = [1, 1]} : vector<16x96xf32> to vector<16x32xf32>
    %13 = vector.extract_strided_slice %11 {offsets = [0, 32], sizes = [16, 32], strides = [1, 1]} : vector<16x96xf32> to vector<16x32xf32>
    %14 = vector.extract_strided_slice %11 {offsets = [0, 64], sizes = [16, 32], strides = [1, 1]} : vector<16x96xf32> to vector<16x32xf32>
    %15 = vector.shape_cast %12 : vector<16x32xf32> to vector<2x8x32xf32>
    %16 = vector.extract_strided_slice %15 {offsets = [0, 0, 0], sizes = [2, 8, 8], strides = [1, 1, 1]} : vector<2x8x32xf32> to vector<2x8x8xf32>
    %17 = vector.extract_strided_slice %15 {offsets = [0, 0, 8], sizes = [2, 8, 8], strides = [1, 1, 1]} : vector<2x8x32xf32> to vector<2x8x8xf32>
    %18 = vector.extract_strided_slice %15 {offsets = [0, 0, 16], sizes = [2, 8, 8], strides = [1, 1, 1]} : vector<2x8x32xf32> to vector<2x8x8xf32>
    %19 = vector.extract_strided_slice %15 {offsets = [0, 0, 24], sizes = [2, 8, 8], strides = [1, 1, 1]} : vector<2x8x32xf32> to vector<2x8x8xf32>
    %20 = tpu.concatenate %16, %17, %18, %19 in 0 : vector<2x8x8xf32>, vector<2x8x8xf32>, vector<2x8x8xf32>, vector<2x8x8xf32> -> vector<8x8x8xf32>
    %21 = vector.shape_cast %13 : vector<16x32xf32> to vector<2x8x32xf32>
    %22 = vector.extract_strided_slice %21 {offsets = [0, 0, 0], sizes = [2, 8, 8], strides = [1, 1, 1]} : vector<2x8x32xf32> to vector<2x8x8xf32>
    %23 = vector.extract_strided_slice %21 {offsets = [0, 0, 8], sizes = [2, 8, 8], strides = [1, 1, 1]} : vector<2x8x32xf32> to vector<2x8x8xf32>
    %24 = vector.extract_strided_slice %21 {offsets = [0, 0, 16], sizes = [2, 8, 8], strides = [1, 1, 1]} : vector<2x8x32xf32> to vector<2x8x8xf32>
    %25 = vector.extract_strided_slice %21 {offsets = [0, 0, 24], sizes = [2, 8, 8], strides = [1, 1, 1]} : vector<2x8x32xf32> to vector<2x8x8xf32>
    %26 = tpu.concatenate %22, %23, %24, %25 in 0 : vector<2x8x8xf32>, vector<2x8x8xf32>, vector<2x8x8xf32>, vector<2x8x8xf32> -> vector<8x8x8xf32>
    %27 = vector.shape_cast %14 : vector<16x32xf32> to vector<2x8x32xf32>
    %28 = vector.extract_strided_slice %27 {offsets = [0, 0, 0], sizes = [2, 8, 8], strides = [1, 1, 1]} : vector<2x8x32xf32> to vector<2x8x8xf32>
    %29 = vector.extract_strided_slice %27 {offsets = [0, 0, 8], sizes = [2, 8, 8], strides = [1, 1, 1]} : vector<2x8x32xf32> to vector<2x8x8xf32>
    %30 = vector.extract_strided_slice %27 {offsets = [0, 0, 16], sizes = [2, 8, 8], strides = [1, 1, 1]} : vector<2x8x32xf32> to vector<2x8x8xf32>
    %31 = vector.extract_strided_slice %27 {offsets = [0, 0, 24], sizes = [2, 8, 8], strides = [1, 1, 1]} : vector<2x8x32xf32> to vector<2x8x8xf32>
    %32 = tpu.concatenate %28, %29, %30, %31 in 0 : vector<2x8x8xf32>, vector<2x8x8xf32>, vector<2x8x8xf32>, vector<2x8x8xf32> -> vector<8x8x8xf32>
    "tpu.trace_start"() <{level = 10 : i32, message = "gqd,gkd->gqk"}> : () -> ()
    %cst_9 = arith.constant dense<0.000000e+00> : vector<8x8x8xf32>
    %33 = tpu.matmul %20, %26, %cst_9 {dimension_numbers = #tpu.dot_dimension_numbers<[2], [2], [1], [1], [0, 0, 0, 1, 1, 1], [0], [0]>} : vector<8x8x8xf32>, vector<8x8x8xf32>, vector<8x8x8xf32> -> vector<8x8x8xf32>
    "tpu.trace_stop"() : () -> ()
    %cst_10 = arith.constant 0.353553385 : f32
    %34 = vector.broadcast %cst_10 : f32 to vector<8x8x8xf32>
    %35 = arith.mulf %33, %34 : vector<8x8x8xf32>
    %cst_11 = arith.constant dense<0xFF800000> : vector<8x8xf32>
    %36 = vector.multi_reduction <maximumf>, %35, %cst_11 [2] : vector<8x8x8xf32> to vector<8x8xf32>
    %37 = vector.shape_cast %36 : vector<8x8xf32> to vector<8x8x1xf32>
    %38 = vector.broadcast %37 : vector<8x8x1xf32> to vector<8x8x8xf32>
    %39 = arith.subf %35, %38 : vector<8x8x8xf32>
    %40 = math.exp %39 : vector<8x8x8xf32>
    %cst_12 = arith.constant dense<0.000000e+00> : vector<8x8xf32>
    %41 = vector.multi_reduction <add>, %40, %cst_12 [2] : vector<8x8x8xf32> to vector<8x8xf32>
    %42 = vector.shape_cast %41 : vector<8x8xf32> to vector<8x8x1xf32>
    %43 = tpu.reciprocal %42 {approx = true} : vector<8x8x1xf32> -> vector<8x8x1xf32>
    %44 = vector.broadcast %43 : vector<8x8x1xf32> to vector<8x8x8xf32>
    %45 = arith.mulf %40, %44 : vector<8x8x8xf32>
    "tpu.trace_start"() <{level = 10 : i32, message = "gqk,gkd->gqd"}> : () -> ()
    %cst_13 = arith.constant dense<0.000000e+00> : vector<8x8x8xf32>
    %46 = tpu.matmul %45, %32, %cst_13 {dimension_numbers = #tpu.dot_dimension_numbers<[2], [1], [1], [2], [0, 0, 0, 1, 1, 2], [0], [0]>} : vector<8x8x8xf32>, vector<8x8x8xf32>, vector<8x8x8xf32> -> vector<8x8x8xf32>
    "tpu.trace_stop"() : () -> ()
    %47 = vector.extract_strided_slice %46 {offsets = [0, 0, 0], sizes = [2, 8, 8], strides = [1, 1, 1]} : vector<8x8x8xf32> to vector<2x8x8xf32>
    %48 = vector.extract_strided_slice %46 {offsets = [2, 0, 0], sizes = [2, 8, 8], strides = [1, 1, 1]} : vector<8x8x8xf32> to vector<2x8x8xf32>
    %49 = vector.extract_strided_slice %46 {offsets = [4, 0, 0], sizes = [2, 8, 8], strides = [1, 1, 1]} : vector<8x8x8xf32> to vector<2x8x8xf32>
    %50 = vector.extract_strided_slice %46 {offsets = [6, 0, 0], sizes = [2, 8, 8], strides = [1, 1, 1]} : vector<8x8x8xf32> to vector<2x8x8xf32>
    %51 = tpu.concatenate %47, %48, %49, %50 in 2 : vector<2x8x8xf32>, vector<2x8x8xf32>, vector<2x8x8xf32>, vector<2x8x8xf32> -> vector<2x8x32xf32>
    %52 = vector.shape_cast %51 : vector<2x8x32xf32> to vector<16x32xf32>
    %c0_14 = arith.constant 0 : index
    %c0_15 = arith.constant 0 : index
    %c0_16 = arith.constant 0 : index
    %53 = vector.load %arg5[%c0_14, %c0_15, %c0_16] : memref<1x32x32xf32, #tpu.memory_space<vmem>>, vector<1x32x32xf32>
    %54 = vector.shape_cast %53 : vector<1x32x32xf32> to vector<32x32xf32>
    %cst_17 = arith.constant dense<0.000000e+00> : vector<16x32xf32>
    %55 = tpu.matmul %52, %54, %cst_17 {dimension_numbers = #tpu.dot_dimension_numbers<[1], [0], [0], [1], [0, 0, 1, 1], [], []>} : vector<16x32xf32>, vector<32x32xf32>, vector<16x32xf32> -> vector<16x32xf32>
    %c0_18 = arith.constant 0 : index
    %c0_19 = arith.constant 0 : index
    %c0_20 = arith.constant 0 : index
    %56 = vector.load %arg6[%c0_18, %c0_19, %c0_20] : memref<1x1x32xf32, #tpu.memory_space<vmem>>, vector<1x1x32xf32>
    %57 = vector.shape_cast %56 : vector<1x1x32xf32> to vector<1x32xf32>
    %58 = vector.broadcast %57 : vector<1x32xf32> to vector<16x32xf32>
    %59 = arith.addf %55, %58 : vector<16x32xf32>
    %60 = arith.addf %4, %59 : vector<16x32xf32>
    %c0_21 = arith.constant 0 : index
    %c0_22 = arith.constant 0 : index
    %c0_23 = arith.constant 0 : index
    %61 = vector.load %arg7[%c0_21, %c0_22, %c0_23] : memref<1x1x32xf32, #tpu.memory_space<vmem>>, vector<1x1x32xf32>
    %62 = vector.shape_cast %61 : vector<1x1x32xf32> to vector<1x32xf32>
    %c0_24 = arith.constant 0 : index
    %c0_25 = arith.constant 0 : index
    %c0_26 = arith.constant 0 : index
    %63 = vector.load %arg8[%c0_24, %c0_25, %c0_26] : memref<1x1x32xf32, #tpu.memory_space<vmem>>, vector<1x1x32xf32>
    %64 = vector.shape_cast %63 : vector<1x1x32xf32> to vector<1x32xf32>
    %cst_27 = arith.constant dense<0.000000e+00> : vector<16xf32>
    %65 = vector.multi_reduction <add>, %60, %cst_27 [1] : vector<16x32xf32> to vector<16xf32>
    %66 = vector.shape_cast %65 : vector<16xf32> to vector<16x1xf32>
    %cst_28 = arith.constant 3.200000e+01 : f32
    %67 = vector.broadcast %cst_28 : f32 to vector<16x1xf32>
    %68 = arith.divf %66, %67 : vector<16x1xf32>
    %69 = vector.broadcast %68 : vector<16x1xf32> to vector<16x32xf32>
    %70 = arith.subf %60, %69 : vector<16x32xf32>
    %71 = arith.mulf %70, %70 : vector<16x32xf32>
    %cst_29 = arith.constant dense<0.000000e+00> : vector<16xf32>
    %72 = vector.multi_reduction <add>, %71, %cst_29 [1] : vector<16x32xf32> to vector<16xf32>
    %73 = vector.shape_cast %72 : vector<16xf32> to vector<16x1xf32>
    %cst_30 = arith.constant 3.200000e+01 : f32
    %74 = vector.broadcast %cst_30 : f32 to vector<16x1xf32>
    %75 = arith.divf %73, %74 : vector<16x1xf32>
    %76 = vector.broadcast %68 : vector<16x1xf32> to vector<16x32xf32>
    %77 = arith.subf %60, %76 : vector<16x32xf32>
    %cst_31 = arith.constant 9.99999974E-6 : f32
    %78 = vector.broadcast %cst_31 : f32 to vector<16x1xf32>
    %79 = arith.addf %75, %78 : vector<16x1xf32>
    %80 = math.rsqrt %79 : vector<16x1xf32>
    %81 = vector.broadcast %80 : vector<16x1xf32> to vector<16x32xf32>
    %82 = arith.mulf %77, %81 : vector<16x32xf32>
    %83 = vector.broadcast %62 : vector<1x32xf32> to vector<16x32xf32>
    %84 = arith.mulf %82, %83 : vector<16x32xf32>
    %85 = vector.broadcast %64 : vector<1x32xf32> to vector<16x32xf32>
    %86 = arith.addf %84, %85 : vector<16x32xf32>
    %c0_32 = arith.constant 0 : index
    %c0_33 = arith.constant 0 : index
    %c0_34 = arith.constant 0 : index
    %87 = vector.load %arg9[%c0_32, %c0_33, %c0_34] : memref<1x32x64xf32, #tpu.memory_space<vmem>>, vector<1x32x64xf32>
    %88 = vector.shape_cast %87 : vector<1x32x64xf32> to vector<32x64xf32>
    %cst_35 = arith.constant dense<0.000000e+00> : vector<16x64xf32>
    %89 = tpu.matmul %86, %88, %cst_35 {dimension_numbers = #tpu.dot_dimension_numbers<[1], [0], [0], [1], [0, 0, 1, 1], [], []>} : vector<16x32xf32>, vector<32x64xf32>, vector<16x64xf32> -> vector<16x64xf32>
    %c0_36 = arith.constant 0 : index
    %c0_37 = arith.constant 0 : index
    %c0_38 = arith.constant 0 : index
    %90 = vector.load %arg10[%c0_36, %c0_37, %c0_38] : memref<1x1x64xf32, #tpu.memory_space<vmem>>, vector<1x1x64xf32>
    %91 = vector.shape_cast %90 : vector<1x1x64xf32> to vector<1x64xf32>
    %92 = vector.broadcast %91 : vector<1x64xf32> to vector<16x64xf32>
    %93 = arith.addf %89, %92 : vector<16x64xf32>
    %cst_39 = arith.constant 5.000000e-01 : f32
    %94 = vector.broadcast %cst_39 : f32 to vector<16x64xf32>
    %95 = arith.mulf %94, %93 : vector<16x64xf32>
    %cst_40 = arith.constant 4.471500e-02 : f32
    %96 = vector.broadcast %cst_40 : f32 to vector<16x64xf32>
    %97 = arith.mulf %96, %93 : vector<16x64xf32>
    %98 = arith.mulf %97, %93 : vector<16x64xf32>
    %99 = arith.mulf %98, %93 : vector<16x64xf32>
    %100 = arith.addf %93, %99 : vector<16x64xf32>
    %cst_41 = arith.constant 0.797884583 : f32
    %101 = vector.broadcast %cst_41 : f32 to vector<16x64xf32>
    %102 = arith.mulf %101, %100 : vector<16x64xf32>
    %103 = math.tanh %102 : vector<16x64xf32>
    %cst_42 = arith.constant 1.000000e+00 : f32
    %104 = vector.broadcast %cst_42 : f32 to vector<16x64xf32>
    %105 = arith.addf %104, %103 : vector<16x64xf32>
    %106 = arith.mulf %95, %105 : vector<16x64xf32>
    %c0_43 = arith.constant 0 : index
    %c0_44 = arith.constant 0 : index
    %c0_45 = arith.constant 0 : index
    %107 = vector.load %arg11[%c0_43, %c0_44, %c0_45] : memref<1x64x32xf32, #tpu.memory_space<vmem>>, vector<1x64x32xf32>
    %108 = vector.shape_cast %107 : vector<1x64x32xf32> to vector<64x32xf32>
    %cst_46 = arith.constant dense<0.000000e+00> : vector<16x32xf32>
    %109 = tpu.matmul %106, %108, %cst_46 {dimension_numbers = #tpu.dot_dimension_numbers<[1], [0], [0], [1], [0, 0, 1, 1], [], []>} : vector<16x64xf32>, vector<64x32xf32>, vector<16x32xf32> -> vector<16x32xf32>
    %c0_47 = arith.constant 0 : index
    %c0_48 = arith.constant 0 : index
    %c0_49 = arith.constant 0 : index
    %110 = vector.load %arg12[%c0_47, %c0_48, %c0_49] : memref<1x1x32xf32, #tpu.memory_space<vmem>>, vector<1x1x32xf32>
    %111 = vector.shape_cast %110 : vector<1x1x32xf32> to vector<1x32xf32>
    %112 = vector.broadcast %111 : vector<1x32xf32> to vector<16x32xf32>
    %113 = arith.addf %109, %112 : vector<16x32xf32>
    %114 = arith.addf %86, %113 : vector<16x32xf32>
    %c0_50 = arith.constant 0 : index
    %c0_51 = arith.constant 0 : index
    %c0_52 = arith.constant 0 : index
    %115 = vector.load %arg13[%c0_50, %c0_51, %c0_52] : memref<1x1x32xf32, #tpu.memory_space<vmem>>, vector<1x1x32xf32>
    %116 = vector.shape_cast %115 : vector<1x1x32xf32> to vector<1x32xf32>
    %c0_53 = arith.constant 0 : index
    %c0_54 = arith.constant 0 : index
    %c0_55 = arith.constant 0 : index
    %117 = vector.load %arg14[%c0_53, %c0_54, %c0_55] : memref<1x1x32xf32, #tpu.memory_space<vmem>>, vector<1x1x32xf32>
    %118 = vector.shape_cast %117 : vector<1x1x32xf32> to vector<1x32xf32>
    %cst_56 = arith.constant dense<0.000000e+00> : vector<16xf32>
    %119 = vector.multi_reduction <add>, %114, %cst_56 [1] : vector<16x32xf32> to vector<16xf32>
    %120 = vector.shape_cast %119 : vector<16xf32> to vector<16x1xf32>
    %cst_57 = arith.constant 3.200000e+01 : f32
    %121 = vector.broadcast %cst_57 : f32 to vector<16x1xf32>
    %122 = arith.divf %120, %121 : vector<16x1xf32>
    %123 = vector.broadcast %122 : vector<16x1xf32> to vector<16x32xf32>
    %124 = arith.subf %114, %123 : vector<16x32xf32>
    %125 = arith.mulf %124, %124 : vector<16x32xf32>
    %cst_58 = arith.constant dense<0.000000e+00> : vector<16xf32>
    %126 = vector.multi_reduction <add>, %125, %cst_58 [1] : vector<16x32xf32> to vector<16xf32>
    %127 = vector.shape_cast %126 : vector<16xf32> to vector<16x1xf32>
    %cst_59 = arith.constant 3.200000e+01 : f32
    %128 = vector.broadcast %cst_59 : f32 to vector<16x1xf32>
    %129 = arith.divf %127, %128 : vector<16x1xf32>
    %130 = vector.broadcast %122 : vector<16x1xf32> to vector<16x32xf32>
    %131 = arith.subf %114, %130 : vector<16x32xf32>
    %cst_60 = arith.constant 9.99999974E-6 : f32
    %132 = vector.broadcast %cst_60 : f32 to vector<16x1xf32>
    %133 = arith.addf %129, %132 : vector<16x1xf32>
    %134 = math.rsqrt %133 : vector<16x1xf32>
    %135 = vector.broadcast %134 : vector<16x1xf32> to vector<16x32xf32>
    %136 = arith.mulf %131, %135 : vector<16x32xf32>
    %137 = vector.broadcast %116 : vector<1x32xf32> to vector<16x32xf32>
    %138 = arith.mulf %136, %137 : vector<16x32xf32>
    %139 = vector.broadcast %118 : vector<1x32xf32> to vector<16x32xf32>
    %140 = arith.addf %138, %139 : vector<16x32xf32>
    %141 = vector.shape_cast %140 : vector<16x32xf32> to vector<2x8x32xf32>
    %c0_61 = arith.constant 0 : index
    %c0_62 = arith.constant 0 : index
    %c0_63 = arith.constant 0 : index
    %142 = vector.load %arg15[%c0_61, %c0_62, %c0_63] : memref<2x8x32xf32, #tpu.memory_space<vmem>>, vector<2x8x32xf32>
    tpu.vector_store %arg15[%c0_61, %c0_62, %c0_63], %141 {strides = array<i32>} : memref<2x8x32xf32, #tpu.memory_space<vmem>>, vector<2x8x32xf32>,
    return
  }
  func.func @transform_0(%arg0: i32, %arg1: i32) -> (i32, i32, i32) {
    %c0_i32 = arith.constant 0 : i32
    %c0_i32_0 = arith.constant 0 : i32
    %c0_i32_1 = arith.constant 0 : i32
    return %arg0, %c0_i32, %c0_i32_0 : i32, i32, i32
  }
  func.func @transform_1(%arg0: i32, %arg1: i32) -> (i32, i32, i32) {
    %c0_i32 = arith.constant 0 : i32
    %c0_i32_0 = arith.constant 0 : i32
    %c0_i32_1 = arith.constant 0 : i32
    return %arg1, %c0_i32, %c0_i32_0 : i32, i32, i32
  }
  func.func @transform_2(%arg0: i32, %arg1: i32) -> (i32, i32, i32) {
    %c0_i32 = arith.constant 0 : i32
    %c0_i32_0 = arith.constant 0 : i32
    %c0_i32_1 = arith.constant 0 : i32
    return %arg1, %c0_i32, %c0_i32_0 : i32, i32, i32
  }
  func.func @transform_3(%arg0: i32, %arg1: i32) -> (i32, i32, i32) {
    %c0_i32 = arith.constant 0 : i32
    %c0_i32_0 = arith.constant 0 : i32
    %c0_i32_1 = arith.constant 0 : i32
    return %arg1, %c0_i32, %c0_i32_0 : i32, i32, i32
  }
  func.func @transform_4(%arg0: i32, %arg1: i32) -> (i32, i32, i32) {
    %c0_i32 = arith.constant 0 : i32
    %c0_i32_0 = arith.constant 0 : i32
    %c0_i32_1 = arith.constant 0 : i32
    return %arg1, %c0_i32, %c0_i32_0 : i32, i32, i32
  }
  func.func @transform_5(%arg0: i32, %arg1: i32) -> (i32, i32, i32) {
    %c0_i32 = arith.constant 0 : i32
    %c0_i32_0 = arith.constant 0 : i32
    %c0_i32_1 = arith.constant 0 : i32
    return %arg1, %c0_i32, %c0_i32_0 : i32, i32, i32
  }
  func.func @transform_6(%arg0: i32, %arg1: i32) -> (i32, i32, i32) {
    %c0_i32 = arith.constant 0 : i32
    %c0_i32_0 = arith.constant 0 : i32
    %c0_i32_1 = arith.constant 0 : i32
    return %arg1, %c0_i32, %c0_i32_0 : i32, i32, i32
  }
  func.func @transform_7(%arg0: i32, %arg1: i32) -> (i32, i32, i32) {
    %c0_i32 = arith.constant 0 : i32
    %c0_i32_0 = arith.constant 0 : i32
    %c0_i32_1 = arith.constant 0 : i32
    return %arg1, %c0_i32, %c0_i32_0 : i32, i32, i32
  }
  func.func @transform_8(%arg0: i32, %arg1: i32) -> (i32, i32, i32) {
    %c0_i32 = arith.constant 0 : i32
    %c0_i32_0 = arith.constant 0 : i32
    %c0_i32_1 = arith.constant 0 : i32
    return %arg1, %c0_i32, %c0_i32_0 : i32, i32, i32
  }
  func.func @transform_9(%arg0: i32, %arg1: i32) -> (i32, i32, i32) {
    %c0_i32 = arith.constant 0 : i32
    %c0_i32_0 = arith.constant 0 : i32
    %c0_i32_1 = arith.constant 0 : i32
    return %arg1, %c0_i32, %c0_i32_0 : i32, i32, i32
  }
  func.func @transform_10(%arg0: i32, %arg1: i32) -> (i32, i32, i32) {
    %c0_i32 = arith.constant 0 : i32
    %c0_i32_0 = arith.constant 0 : i32
    %c0_i32_1 = arith.constant 0 : i32
    return %arg1, %c0_i32, %c0_i32_0 : i32, i32, i32
  }
  func.func @transform_11(%arg0: i32, %arg1: i32) -> (i32, i32, i32) {
    %c0_i32 = arith.constant 0 : i32
    %c0_i32_0 = arith.constant 0 : i32
    %c0_i32_1 = arith.constant 0 : i32
    return %arg1, %c0_i32, %c0_i32_0 : i32, i32, i32
  }
  func.func @transform_12(%arg0: i32, %arg1: i32) -> (i32, i32, i32) {
    %c0_i32 = arith.constant 0 : i32
    %c0_i32_0 = arith.constant 0 : i32
    %c0_i32_1 = arith.constant 0 : i32
    return %arg1, %c0_i32, %c0_i32_0 : i32, i32, i32
  }
  func.func @transform_13(%arg0: i32, %arg1: i32) -> (i32, i32, i32) {
    %c0_i32 = arith.constant 0 : i32
    %c0_i32_0 = arith.constant 0 : i32
    %c0_i32_1 = arith.constant 0 : i32
    return %arg0, %c0_i32, %c0_i32_0 : i32, i32, i32
  }
}

</mosaic_0001>

<llo_original>
// kernel: tpu_custom_call.1
$region0: #{tpu_custom_call.1}
  #allocation0 [shape = 'u32[]', space=smem, size = 0x4, offset = 0x4, fixed_abs, tag = 'smem constant byte address 0x4 - core index']
  #allocation1 [shape = 'u32[144,128]{1,0:T(1,128)}', space=vmem, size = 0x12000, scoped, tag = 'internal scratch']
  %s0 = inlined_call_operand.hbm [shape: f32[2,8,32], index: 0, kind: input, shape index: {}]
  %s1 = inlined_call_operand.vmem [shape: f32[2,32,96], index: 1, kind: input, shape index: {}]
  %s2 = inlined_call_operand.vmem [shape: f32[2,1,96], index: 2, kind: input, shape index: {}]
  %s3 = inlined_call_operand.vmem [shape: f32[2,32,32], index: 3, kind: input, shape index: {}]
  %s4 = inlined_call_operand.vmem [shape: f32[2,1,32], index: 4, kind: input, shape index: {}]
  %s5 = inlined_call_operand.vmem [shape: f32[2,1,32], index: 5, kind: input, shape index: {}]
  %s6 = inlined_call_operand.vmem [shape: f32[2,1,32], index: 6, kind: input, shape index: {}]
  %s7 = inlined_call_operand.vmem [shape: f32[2,32,64], index: 7, kind: input, shape index: {}]
  %s8 = inlined_call_operand.vmem [shape: f32[2,1,64], index: 8, kind: input, shape index: {}]
  %s9 = inlined_call_operand.vmem [shape: f32[2,64,32], index: 9, kind: input, shape index: {}]
  %s10 = inlined_call_operand.vmem [shape: f32[2,1,32], index: 10, kind: input, shape index: {}]
  %s11 = inlined_call_operand.vmem [shape: f32[2,1,32], index: 11, kind: input, shape index: {}]
  %s12 = inlined_call_operand.vmem [shape: f32[2,1,32], index: 12, kind: input, shape index: {}]
  %s13 = inlined_call_operand.hbm [shape: f32[2,8,32], index: 13, kind: output, shape index: {}]
  %s14 = sld [smem:[#allocation0]]
  $region93: #{tpu_custom_call.1} parent=0
    _
  %s16 = ssub.s32 1, %s14
  %s17 = scalar_select 0, %s16, %s14
  $region1: #{tpu_custom_call.1} parent=0
    #allocation2 [shape = 'u8[8192]{0}', space=vmem, size = 0x2000, scoped, tag = 'input window, operand 0, single buffered']
    #allocation3 [shape = 's32[2]{0}', space=sflag, size = 0x8, scoped, tag = 'scoped memory for tpu_custom_call.1']
    #allocation4 [shape = 's32[2]{0}', space=sflag, size = 0x8, scoped, tag = 'scoped memory for tpu_custom_call.1']
    #allocation5 [shape = 'u8[8192]{0}', space=vmem, size = 0x2000, scoped, tag = 'output window, operand 0, single buffered']
    %18 = vsyncpa [#allocation3], 0
    %19 = vsyncpa [#allocation4], 0
    loop: start=0, step=1, limit=4
    $region2: #{tpu_custom_call.1} parent=1 // loop_pre_header
      _
    $region3: #{tpu_custom_call.1} parent=1 // loop_header
      %s21 = sphi 0, %s25
      %p22 = scmp.ge.s32.totalorder %s21, 4
      %s28 = sphi 0, %s40
      %s29 = sphi 0, %s36
      %s30 = sphi 0, %s28
      %s31 = sphi 0, %s29
      %s32 = sphi 0, %s30
      %s33 = sphi 0, %s31
      %s43 = sphi 0, %s45
      %s46 = sphi 0, %s43
      %s47 = sphi 0, %s46
      %s63 = sphi 0, %s47
      %s69 = sphi 0, %s71
      %s72 = sphi 0, %s69
      %s73 = sphi 0, %s72
      %s89 = sphi 0, %s73
      %s95 = sphi 0, %s97
      %s98 = sphi 0, %s95
      %s99 = sphi 0, %s98
      %s115 = sphi 0, %s99
      %s121 = sphi 0, %s123
      %s124 = sphi 0, %s121
      %s125 = sphi 0, %s124
      %s141 = sphi 0, %s125
      %s147 = sphi 0, %s149
      %s150 = sphi 0, %s147
      %s151 = sphi 0, %s150
      %s167 = sphi 0, %s151
      %s173 = sphi 0, %s175
      %s176 = sphi 0, %s173
      %s177 = sphi 0, %s176
      %s193 = sphi 0, %s177
      %s199 = sphi 0, %s201
      %s202 = sphi 0, %s199
      %s203 = sphi 0, %s202
      %s219 = sphi 0, %s203
      %s225 = sphi 0, %s227
      %s228 = sphi 0, %s225
      %s229 = sphi 0, %s228
      %s245 = sphi 0, %s229
      %s251 = sphi 0, %s253
      %s254 = sphi 0, %s251
      %s255 = sphi 0, %s254
      %s271 = sphi 0, %s255
      %s277 = sphi 0, %s279
      %s280 = sphi 0, %s277
      %s281 = sphi 0, %s280
      %s297 = sphi 0, %s281
      %s303 = sphi 0, %s305
      %s306 = sphi 0, %s303
      %s307 = sphi 0, %s306
      %s323 = sphi 0, %s307
      %s329 = sphi 0, %s331
      %s332 = sphi 0, %s329
      %s333 = sphi 0, %s332
      %s349 = sphi 0, %s333
      %s355 = sphi 0, %s357
      %s358 = sphi 0, %s355
      %s359 = sphi 0, %s358
      %s375 = sphi 0, %s359
      %s381 = sphi 0, %s383
      %s384 = sphi 0, %s381
      %s385 = sphi 0, %s384
      %s401 = sphi 0, %s385
    $region4: #{tpu_custom_call.1} parent=1 // loop_header_branch
      %24 = sbr.rel (%p22) target = $region8
    $region5: #{tpu_custom_call.1} parent=1 // loop_body
      %s26 = ssub.s32 %s21, 1
      %s27 = ssub.s32 %s21, 2
      %s34 = sadd.s32 1, %s29
      %p35 = scmp.ge.s32.totalorder %s34, 2
      %s36 = scalar_select %p35, 0, %s34
      %s37 = sadd.s32 1, %s28
      %s38 = scalar_select %p35, %s37, %s28
      %p39 = scmp.ge.s32.totalorder %s38, 1
      %s40 = scalar_select %p39, 0, %s38
      %s41 = ssub.s32 %s28, %s40
      %p42 = scmp.eq.s32.totalorder %s41, 0
      %s44 = sadd.s32 %s43, 1
      %s45 = scalar_select %p42, %s43, %s44
      %p48 = pneg %p42
      %p49 = scmp.eq.s32.totalorder %s21, 1
      %p50 = por %p48, %p49
      %p51 = scmp.ne.s32.totalorder %s43, %s46
      %p52 = scmp.eq.s32.totalorder %s21, 0
      %p53 = por %p51, %p52
      %p54 = scmp.ne.s32.totalorder %s43, %s46
      %p55 = scmp.eq.s32.totalorder %s26, 1
      %p56 = por %p54, %p55
      %p57 = scmp.ne.s32.totalorder %s46, %s47
      %p58 = scmp.eq.s32.totalorder %s26, 0
      %p59 = por %p57, %p58
      %p60 = scmp.ne.s32.totalorder %s46, %s47
      %p61 = scmp.eq.s32.totalorder %s27, 1
      %p62 = por %p60, %p61
      %p64 = scmp.ne.s32.totalorder %s47, %s63
      %p65 = scmp.eq.s32.totalorder %s27, 0
      %p66 = por %p64, %p65
      %s67 = ssub.s32 %s29, %s36
      %p68 = scmp.eq.s32.totalorder %s67, 0
      %s70 = sadd.s32 %s69, 1
      %s71 = scalar_select %p68, %s69, %s70
      %p74 = pneg %p68
      %p75 = scmp.eq.s32.totalorder %s21, 1
      %p76 = por %p74, %p75
      %p77 = scmp.ne.s32.totalorder %s69, %s72
      %p78 = scmp.eq.s32.totalorder %s21, 0
      %p79 = por %p77, %p78
      %p80 = scmp.ne.s32.totalorder %s69, %s72
      %p81 = scmp.eq.s32.totalorder %s26, 1
      %p82 = por %p80, %p81
      %p83 = scmp.ne.s32.totalorder %s72, %s73
      %p84 = scmp.eq.s32.totalorder %s26, 0
      %p85 = por %p83, %p84
      %p86 = scmp.ne.s32.totalorder %s72, %s73
      %p87 = scmp.eq.s32.totalorder %s27, 1
      %p88 = por %p86, %p87
      %p90 = scmp.ne.s32.totalorder %s73, %s89
      %p91 = scmp.eq.s32.totalorder %s27, 0
      %p92 = por %p90, %p91
      %s93 = ssub.s32 %s29, %s36
      %p94 = scmp.eq.s32.totalorder %s93, 0
      %s96 = sadd.s32 %s95, 1
      %s97 = scalar_select %p94, %s95, %s96
      %p100 = pneg %p94
      %p101 = scmp.eq.s32.totalorder %s21, 1
      %p102 = por %p100, %p101
      %p103 = scmp.ne.s32.totalorder %s95, %s98
      %p104 = scmp.eq.s32.totalorder %s21, 0
      %p105 = por %p103, %p104
      %p106 = scmp.ne.s32.totalorder %s95, %s98
      %p107 = scmp.eq.s32.totalorder %s26, 1
      %p108 = por %p106, %p107
      %p109 = scmp.ne.s32.totalorder %s98, %s99
      %p110 = scmp.eq.s32.totalorder %s26, 0
      %p111 = por %p109, %p110
      %p112 = scmp.ne.s32.totalorder %s98, %s99
      %p113 = scmp.eq.s32.totalorder %s27, 1
      %p114 = por %p112, %p113
      %p116 = scmp.ne.s32.totalorder %s99, %s115
      %p117 = scmp.eq.s32.totalorder %s27, 0
      %p118 = por %p116, %p117
      %s119 = ssub.s32 %s29, %s36
      %p120 = scmp.eq.s32.totalorder %s119, 0
      %s122 = sadd.s32 %s121, 1
      %s123 = scalar_select %p120, %s121, %s122
      %p126 = pneg %p120
      %p127 = scmp.eq.s32.totalorder %s21, 1
      %p128 = por %p126, %p127
      %p129 = scmp.ne.s32.totalorder %s121, %s124
      %p130 = scmp.eq.s32.totalorder %s21, 0
      %p131 = por %p129, %p130
      %p132 = scmp.ne.s32.totalorder %s121, %s124
      %p133 = scmp.eq.s32.totalorder %s26, 1
      %p134 = por %p132, %p133
      %p135 = scmp.ne.s32.totalorder %s124, %s125
      %p136 = scmp.eq.s32.totalorder %s26, 0
      %p137 = por %p135, %p136
      %p138 = scmp.ne.s32.totalorder %s124, %s125
      %p139 = scmp.eq.s32.totalorder %s27, 1
      %p140 = por %p138, %p139
      %p142 = scmp.ne.s32.totalorder %s125, %s141
      %p143 = scmp.eq.s32.totalorder %s27, 0
      %p144 = por %p142, %p143
      %s145 = ssub.s32 %s29, %s36
      %p146 = scmp.eq.s32.totalorder %s145, 0
      %s148 = sadd.s32 %s147, 1
      %s149 = scalar_select %p146, %s147, %s148
      %p152 = pneg %p146
      %p153 = scmp.eq.s32.totalorder %s21, 1
      %p154 = por %p152, %p153
      %p155 = scmp.ne.s32.totalorder %s147, %s150
      %p156 = scmp.eq.s32.totalorder %s21, 0
      %p157 = por %p155, %p156
      %p158 = scmp.ne.s32.totalorder %s147, %s150
      %p159 = scmp.eq.s32.totalorder %s26, 1
      %p160 = por %p158, %p159
      %p161 = scmp.ne.s32.totalorder %s150, %s151
      %p162 = scmp.eq.s32.totalorder %s26, 0
      %p163 = por %p161, %p162
      %p164 = scmp.ne.s32.totalorder %s150, %s151
      %p165 = scmp.eq.s32.totalorder %s27, 1
      %p166 = por %p164, %p165
      %p168 = scmp.ne.s32.totalorder %s151, %s167
      %p169 = scmp.eq.s32.totalorder %s27, 0
      %p170 = por %p168, %p169
      %s171 = ssub.s32 %s29, %s36
      %p172 = scmp.eq.s32.totalorder %s171, 0
      %s174 = sadd.s32 %s173, 1
      %s175 = scalar_select %p172, %s173, %s174
      %p178 = pneg %p172
      %p179 = scmp.eq.s32.totalorder %s21, 1
      %p180 = por %p178, %p179
      %p181 = scmp.ne.s32.totalorder %s173, %s176
      %p182 = scmp.eq.s32.totalorder %s21, 0
      %p183 = por %p181, %p182
      %p184 = scmp.ne.s32.totalorder %s173, %s176
      %p185 = scmp.eq.s32.totalorder %s26, 1
      %p186 = por %p184, %p185
      %p187 = scmp.ne.s32.totalorder %s176, %s177
      %p188 = scmp.eq.s32.totalorder %s26, 0
      %p189 = por %p187, %p188
      %p190 = scmp.ne.s32.totalorder %s176, %s177
      %p191 = scmp.eq.s32.totalorder %s27, 1
      %p192 = por %p190, %p191
      %p194 = scmp.ne.s32.totalorder %s177, %s193
      %p195 = scmp.eq.s32.totalorder %s27, 0
      %p196 = por %p194, %p195
      %s197 = ssub.s32 %s29, %s36
      %p198 = scmp.eq.s32.totalorder %s197, 0
      %s200 = sadd.s32 %s199, 1
      %s201 = scalar_select %p198, %s199, %s200
      %p204 = pneg %p198
      %p205 = scmp.eq.s32.totalorder %s21, 1
      %p206 = por %p204, %p205
      %p207 = scmp.ne.s32.totalorder %s199, %s202
      %p208 = scmp.eq.s32.totalorder %s21, 0
      %p209 = por %p207, %p208
      %p210 = scmp.ne.s32.totalorder %s199, %s202
      %p211 = scmp.eq.s32.totalorder %s26, 1
      %p212 = por %p210, %p211
      %p213 = scmp.ne.s32.totalorder %s202, %s203
      %p214 = scmp.eq.s32.totalorder %s26, 0
      %p215 = por %p213, %p214
      %p216 = scmp.ne.s32.totalorder %s202, %s203
      %p217 = scmp.eq.s32.totalorder %s27, 1
      %p218 = por %p216, %p217
      %p220 = scmp.ne.s32.totalorder %s203, %s219
      %p221 = scmp.eq.s32.totalorder %s27, 0
      %p222 = por %p220, %p221
      %s223 = ssub.s32 %s29, %s36
      %p224 = scmp.eq.s32.totalorder %s223, 0
      %s226 = sadd.s32 %s225, 1
      %s227 = scalar_select %p224, %s225, %s226
      %p230 = pneg %p224
      %p231 = scmp.eq.s32.totalorder %s21, 1
      %p232 = por %p230, %p231
      %p233 = scmp.ne.s32.totalorder %s225, %s228
      %p234 = scmp.eq.s32.totalorder %s21, 0
      %p235 = por %p233, %p234
      %p236 = scmp.ne.s32.totalorder %s225, %s228
      %p237 = scmp.eq.s32.totalorder %s26, 1
      %p238 = por %p236, %p237
      %p239 = scmp.ne.s32.totalorder %s228, %s229
      %p240 = scmp.eq.s32.totalorder %s26, 0
      %p241 = por %p239, %p240
      %p242 = scmp.ne.s32.totalorder %s228, %s229
      %p243 = scmp.eq.s32.totalorder %s27, 1
      %p244 = por %p242, %p243
      %p246 = scmp.ne.s32.totalorder %s229, %s245
      %p247 = scmp.eq.s32.totalorder %s27, 0
      %p248 = por %p246, %p247
      %s249 = ssub.s32 %s29, %s36
      %p250 = scmp.eq.s32.totalorder %s249, 0
      %s252 = sadd.s32 %s251, 1
      %s253 = scalar_select %p250, %s251, %s252
      %p256 = pneg %p250
      %p257 = scmp.eq.s32.totalorder %s21, 1
      %p258 = por %p256, %p257
      %p259 = scmp.ne.s32.totalorder %s251, %s254
      %p260 = scmp.eq.s32.totalorder %s21, 0
      %p261 = por %p259, %p260
      %p262 = scmp.ne.s32.totalorder %s251, %s254
      %p263 = scmp.eq.s32.totalorder %s26, 1
      %p264 = por %p262, %p263
      %p265 = scmp.ne.s32.totalorder %s254, %s255
      %p266 = scmp.eq.s32.totalorder %s26, 0
      %p267 = por %p265, %p266
      %p268 = scmp.ne.s32.totalorder %s254, %s255
      %p269 = scmp.eq.s32.totalorder %s27, 1
      %p270 = por %p268, %p269
      %p272 = scmp.ne.s32.totalorder %s255, %s271
      %p273 = scmp.eq.s32.totalorder %s27, 0
      %p274 = por %p272, %p273
      %s275 = ssub.s32 %s29, %s36
      %p276 = scmp.eq.s32.totalorder %s275, 0
      %s278 = sadd.s32 %s277, 1
      %s279 = scalar_select %p276, %s277, %s278
      %p282 = pneg %p276
      %p283 = scmp.eq.s32.totalorder %s21, 1
      %p284 = por %p282, %p283
      %p285 = scmp.ne.s32.totalorder %s277, %s280
      %p286 = scmp.eq.s32.totalorder %s21, 0
      %p287 = por %p285, %p286
      %p288 = scmp.ne.s32.totalorder %s277, %s280
      %p289 = scmp.eq.s32.totalorder %s26, 1
      %p290 = por %p288, %p289
      %p291 = scmp.ne.s32.totalorder %s280, %s281
      %p292 = scmp.eq.s32.totalorder %s26, 0
      %p293 = por %p291, %p292
      %p294 = scmp.ne.s32.totalorder %s280, %s281
      %p295 = scmp.eq.s32.totalorder %s27, 1
      %p296 = por %p294, %p295
      %p298 = scmp.ne.s32.totalorder %s281, %s297
      %p299 = scmp.eq.s32.totalorder %s27, 0
      %p300 = por %p298, %p299
      %s301 = ssub.s32 %s29, %s36
      %p302 = scmp.eq.s32.totalorder %s301, 0
      %s304 = sadd.s32 %s303, 1
      %s305 = scalar_select %p302, %s303, %s304
      %p308 = pneg %p302
      %p309 = scmp.eq.s32.totalorder %s21, 1
      %p310 = por %p308, %p309
      %p311 = scmp.ne.s32.totalorder %s303, %s306
      %p312 = scmp.eq.s32.totalorder %s21, 0
      %p313 = por %p311, %p312
      %p314 = scmp.ne.s32.totalorder %s303, %s306
      %p315 = scmp.eq.s32.totalorder %s26, 1
      %p316 = por %p314, %p315
      %p317 = scmp.ne.s32.totalorder %s306, %s307
      %p318 = scmp.eq.s32.totalorder %s26, 0
      %p319 = por %p317, %p318
      %p320 = scmp.ne.s32.totalorder %s306, %s307
      %p321 = scmp.eq.s32.totalorder %s27, 1
      %p322 = por %p320, %p321
      %p324 = scmp.ne.s32.totalorder %s307, %s323
      %p325 = scmp.eq.s32.totalorder %s27, 0
      %p326 = por %p324, %p325
      %s327 = ssub.s32 %s29, %s36
      %p328 = scmp.eq.s32.totalorder %s327, 0
      %s330 = sadd.s32 %s329, 1
      %s331 = scalar_select %p328, %s329, %s330
      %p334 = pneg %p328
      %p335 = scmp.eq.s32.totalorder %s21, 1
      %p336 = por %p334, %p335
      %p337 = scmp.ne.s32.totalorder %s329, %s332
      %p338 = scmp.eq.s32.totalorder %s21, 0
      %p339 = por %p337, %p338
      %p340 = scmp.ne.s32.totalorder %s329, %s332
      %p341 = scmp.eq.s32.totalorder %s26, 1
      %p342 = por %p340, %p341
      %p343 = scmp.ne.s32.totalorder %s332, %s333
      %p344 = scmp.eq.s32.totalorder %s26, 0
      %p345 = por %p343, %p344
      %p346 = scmp.ne.s32.totalorder %s332, %s333
      %p347 = scmp.eq.s32.totalorder %s27, 1
      %p348 = por %p346, %p347
      %p350 = scmp.ne.s32.totalorder %s333, %s349
      %p351 = scmp.eq.s32.totalorder %s27, 0
      %p352 = por %p350, %p351
      %s353 = ssub.s32 %s29, %s36
      %p354 = scmp.eq.s32.totalorder %s353, 0
      %s356 = sadd.s32 %s355, 1
      %s357 = scalar_select %p354, %s355, %s356
      %p360 = pneg %p354
      %p361 = scmp.eq.s32.totalorder %s21, 1
      %p362 = por %p360, %p361
      %p363 = scmp.ne.s32.totalorder %s355, %s358
      %p364 = scmp.eq.s32.totalorder %s21, 0
      %p365 = por %p363, %p364
      %p366 = scmp.ne.s32.totalorder %s355, %s358
      %p367 = scmp.eq.s32.totalorder %s26, 1
      %p368 = por %p366, %p367
      %p369 = scmp.ne.s32.totalorder %s358, %s359
      %p370 = scmp.eq.s32.totalorder %s26, 0
      %p371 = por %p369, %p370
      %p372 = scmp.ne.s32.totalorder %s358, %s359
      %p373 = scmp.eq.s32.totalorder %s27, 1
      %p374 = por %p372, %p373
      %p376 = scmp.ne.s32.totalorder %s359, %s375
      %p377 = scmp.eq.s32.totalorder %s27, 0
      %p378 = por %p376, %p377
      %s379 = ssub.s32 %s28, %s40
      %p380 = scmp.eq.s32.totalorder %s379, 0
      %s382 = sadd.s32 %s381, 1
      %s383 = scalar_select %p380, %s381, %s382
      %p386 = pneg %p380
      %p387 = scmp.eq.s32.totalorder %s21, 1
      %p388 = por %p386, %p387
      %p389 = scmp.ne.s32.totalorder %s381, %s384
      %p390 = scmp.eq.s32.totalorder %s21, 0
      %p391 = por %p389, %p390
      %p392 = scmp.ne.s32.totalorder %s381, %s384
      %p393 = scmp.eq.s32.totalorder %s26, 1
      %p394 = por %p392, %p393
      %p395 = scmp.ne.s32.totalorder %s384, %s385
      %p396 = scmp.eq.s32.totalorder %s26, 0
      %p397 = por %p395, %p396
      %p398 = scmp.ne.s32.totalorder %s384, %s385
      %p399 = scmp.eq.s32.totalorder %s27, 1
      %p400 = por %p398, %p399
      %p402 = scmp.ne.s32.totalorder %s385, %s401
      %p403 = scmp.eq.s32.totalorder %s27, 0
      %p404 = por %p402, %p403
      %p405 = scmp.le.s32.totalorder 1, %s21
      %p406 = scmp.lt.s32.totalorder %s21, 3
      %p407 = pnand %p405, %p406
      %p408 = pneg %p407
      // Predicated region
      $region9: #{tpu_custom_call.1} parent=5 // pred_check
        _
      $region10: #{tpu_custom_call.1} parent=5 // pred_check_branch
        %410 = sbr.rel (%p407) target = $region12
      $region11: #{tpu_custom_call.1} parent=5 // pred_region
        %s411 = ssub.s32 %s21, 1
        // Predicated region
        $region13: #{tpu_custom_call.1} parent=11 // pred_check
          %p412 = pneg %p59
        $region14: #{tpu_custom_call.1} parent=11 // pred_check_branch
          %414 = sbr.rel (%p412) target = $region16
        $region15: #{tpu_custom_call.1} parent=11 // pred_region
          %s415 = smul.u32 2, %s30
          %s417 = ssub.s32 256, 256
          %418 = vsyncadd [#allocation3], %s417
          %s419 = smul.addr %s415, 128
          %s420 = scalar_lea.hbm %s0, %s419
          %s421 = sshll.u32 [#allocation2], 4
          %s422 = int_to_ptr.vmem [resolvable:$true] %s421
          %427 = dma.hbm_to_vmem [thread:$0]  %s420, 256, %s422, [#allocation3], 128, 128, 8
        $region16: #{tpu_custom_call.1} parent=11 // pred_fallthru
          _
      $region12: #{tpu_custom_call.1} parent=5 // pred_fallthru
        _
      %p428 = scmp.lt.s32.totalorder %s21, 2
      // Predicated region
      $region17: #{tpu_custom_call.1} parent=5 // pred_check
        %p429 = pneg %p428
      $region18: #{tpu_custom_call.1} parent=5 // pred_check_branch
        %431 = sbr.rel (%p429) target = $region20
      $region19: #{tpu_custom_call.1} parent=5 // pred_region
        // Predicated region
        $region21: #{tpu_custom_call.1} parent=19 // pred_check
          %p432 = pneg %p79
        $region22: #{tpu_custom_call.1} parent=19 // pred_check_branch
          %434 = sbr.rel (%p432) target = $region24
        $region23: #{tpu_custom_call.1} parent=19 // pred_region
          %p435 = scmp.lt.s32.totalorder %s29, 1
          %s436 = scalar_select %p435, %s29, 1
          %s437 = smul.addr %s436, 4
          %s438 = smul.addr %s437, 8
          %s439 = scalar_lea.vmem %s1, %s438
        $region24: #{tpu_custom_call.1} parent=19 // pred_fallthru
          _
        // Predicated region
        $region25: #{tpu_custom_call.1} parent=19 // pred_check
          %p440 = pneg %p105
        $region26: #{tpu_custom_call.1} parent=19 // pred_check_branch
          %442 = sbr.rel (%p440) target = $region28
        $region27: #{tpu_custom_call.1} parent=19 // pred_region
          %p443 = scmp.lt.s32.totalorder %s29, 1
          %s444 = scalar_select %p443, %s29, 1
          %s445 = scalar_lea.vmem %s2, %s444
        $region28: #{tpu_custom_call.1} parent=19 // pred_fallthru
          _
        // Predicated region
        $region29: #{tpu_custom_call.1} parent=19 // pred_check
          %p446 = pneg %p131
        $region30: #{tpu_custom_call.1} parent=19 // pred_check_branch
          %448 = sbr.rel (%p446) target = $region32
        $region31: #{tpu_custom_call.1} parent=19 // pred_region
          %p449 = scmp.lt.s32.totalorder %s29, 1
          %s450 = scalar_select %p449, %s29, 1
          %s451 = smul.addr %s450, 4
          %s452 = smul.addr %s451, 8
          %s453 = scalar_lea.vmem %s3, %s452
        $region32: #{tpu_custom_call.1} parent=19 // pred_fallthru
          _
        // Predicated region
        $region33: #{tpu_custom_call.1} parent=19 // pred_check
          %p454 = pneg %p157
        $region34: #{tpu_custom_call.1} parent=19 // pred_check_branch
          %456 = sbr.rel (%p454) target = $region36
        $region35: #{tpu_custom_call.1} parent=19 // pred_region
          %p457 = scmp.lt.s32.totalorder %s29, 1
          %s458 = scalar_select %p457, %s29, 1
          %s459 = scalar_lea.vmem %s4, %s458
        $region36: #{tpu_custom_call.1} parent=19 // pred_fallthru
          _
        // Predicated region
        $region37: #{tpu_custom_call.1} parent=19 // pred_check
          %p460 = pneg %p183
        $region38: #{tpu_custom_call.1} parent=19 // pred_check_branch
          %462 = sbr.rel (%p460) target = $region40
        $region39: #{tpu_custom_call.1} parent=19 // pred_region
          %p463 = scmp.lt.s32.totalorder %s29, 1
          %s464 = scalar_select %p463, %s29, 1
          %s465 = scalar_lea.vmem %s5, %s464
        $region40: #{tpu_custom_call.1} parent=19 // pred_fallthru
          _
        // Predicated region
        $region41: #{tpu_custom_call.1} parent=19 // pred_check
          %p466 = pneg %p209
        $region42: #{tpu_custom_call.1} parent=19 // pred_check_branch
          %468 = sbr.rel (%p466) target = $region44
        $region43: #{tpu_custom_call.1} parent=19 // pred_region
          %p469 = scmp.lt.s32.totalorder %s29, 1
          %s470 = scalar_select %p469, %s29, 1
          %s471 = scalar_lea.vmem %s6, %s470
        $region44: #{tpu_custom_call.1} parent=19 // pred_fallthru
          _
        // Predicated region
        $region45: #{tpu_custom_call.1} parent=19 // pred_check
          %p472 = pneg %p235
        $region46: #{tpu_custom_call.1} parent=19 // pred_check_branch
          %474 = sbr.rel (%p472) target = $region48
        $region47: #{tpu_custom_call.1} parent=19 // pred_region
          %p475 = scmp.lt.s32.totalorder %s29, 1
          %s476 = scalar_select %p475, %s29, 1
          %s477 = smul.addr %s476, 4
          %s478 = smul.addr %s477, 8
          %s479 = scalar_lea.vmem %s7, %s478
        $region48: #{tpu_custom_call.1} parent=19 // pred_fallthru
          _
        // Predicated region
        $region49: #{tpu_custom_call.1} parent=19 // pred_check
          %p480 = pneg %p261
        $region50: #{tpu_custom_call.1} parent=19 // pred_check_branch
          %482 = sbr.rel (%p480) target = $region52
        $region51: #{tpu_custom_call.1} parent=19 // pred_region
          %p483 = scmp.lt.s32.totalorder %s29, 1
          %s484 = scalar_select %p483, %s29, 1
          %s485 = scalar_lea.vmem %s8, %s484
        $region52: #{tpu_custom_call.1} parent=19 // pred_fallthru
          _
        // Predicated region
        $region53: #{tpu_custom_call.1} parent=19 // pred_check
          %p486 = pneg %p287
        $region54: #{tpu_custom_call.1} parent=19 // pred_check_branch
          %488 = sbr.rel (%p486) target = $region56
        $region55: #{tpu_custom_call.1} parent=19 // pred_region
          %p489 = scmp.lt.s32.totalorder %s29, 1
          %s490 = scalar_select %p489, %s29, 1
          %s491 = smul.addr %s490, 8
          %s492 = smul.addr %s491, 8
          %s493 = scalar_lea.vmem %s9, %s492
        $region56: #{tpu_custom_call.1} parent=19 // pred_fallthru
          _
        // Predicated region
        $region57: #{tpu_custom_call.1} parent=19 // pred_check
          %p494 = pneg %p313
        $region58: #{tpu_custom_call.1} parent=19 // pred_check_branch
          %496 = sbr.rel (%p494) target = $region60
        $region59: #{tpu_custom_call.1} parent=19 // pred_region
          %p497 = scmp.lt.s32.totalorder %s29, 1
          %s498 = scalar_select %p497, %s29, 1
          %s499 = scalar_lea.vmem %s10, %s498
        $region60: #{tpu_custom_call.1} parent=19 // pred_fallthru
          _
        // Predicated region
        $region61: #{tpu_custom_call.1} parent=19 // pred_check
          %p500 = pneg %p339
        $region62: #{tpu_custom_call.1} parent=19 // pred_check_branch
          %502 = sbr.rel (%p500) target = $region64
        $region63: #{tpu_custom_call.1} parent=19 // pred_region
          %p503 = scmp.lt.s32.totalorder %s29, 1
          %s504 = scalar_select %p503, %s29, 1
          %s505 = scalar_lea.vmem %s11, %s504
        $region64: #{tpu_custom_call.1} parent=19 // pred_fallthru
          _
        // Predicated region
        $region65: #{tpu_custom_call.1} parent=19 // pred_check
          %p506 = pneg %p365
        $region66: #{tpu_custom_call.1} parent=19 // pred_check_branch
          %508 = sbr.rel (%p506) target = $region68
        $region67: #{tpu_custom_call.1} parent=19 // pred_region
          %p509 = scmp.lt.s32.totalorder %s29, 1
          %s510 = scalar_select %p509, %s29, 1
          %s511 = scalar_lea.vmem %s12, %s510
        $region68: #{tpu_custom_call.1} parent=19 // pred_fallthru
          _
      $region20: #{tpu_custom_call.1} parent=5 // pred_fallthru
        _
      %p512 = scmp.le.s32.totalorder 1, %s21
      %p513 = scmp.lt.s32.totalorder %s21, 3
      %p514 = pnand %p512, %p513
      %p515 = pneg %p514
      // Predicated region
      $region69: #{tpu_custom_call.1} parent=5 // pred_check
        _
      $region70: #{tpu_custom_call.1} parent=5 // pred_check_branch
        %517 = sbr.rel (%p514) target = $region72
      $region71: #{tpu_custom_call.1} parent=5 // pred_region
        %s518 = ssub.s32 %s21, 1
        // Predicated region
        $region73: #{tpu_custom_call.1} parent=71 // pred_check
          %p519 = pneg %p59
        $region74: #{tpu_custom_call.1} parent=71 // pred_check_branch
          %521 = sbr.rel (%p519) target = $region76
        $region75: #{tpu_custom_call.1} parent=71 // pred_region
          %522 = dma.done [#allocation3], 256
        $region76: #{tpu_custom_call.1} parent=71 // pred_fallthru
          _
        %p523 = pneg %p59
        %p524 = pneg %p56
        %p525 = scmp.lt.s32.totalorder %s31, 1
        %s526 = scalar_select %p525, %s31, 1
        %s527 = smul.addr %s526, 4
        %s528 = smul.addr %s527, 8
        %s529 = scalar_lea.vmem %s1, %s528
        %p530 = pneg %p85
        %p531 = pneg %p82
        %p532 = scmp.lt.s32.totalorder %s31, 1
        %s533 = scalar_select %p532, %s31, 1
        %s534 = scalar_lea.vmem %s2, %s533
        %p535 = pneg %p111
        %p536 = pneg %p108
        %p537 = scmp.lt.s32.totalorder %s31, 1
        %s538 = scalar_select %p537, %s31, 1
        %s539 = smul.addr %s538, 4
        %s540 = smul.addr %s539, 8
        %s541 = scalar_lea.vmem %s3, %s540
        %p542 = pneg %p137
        %p543 = pneg %p134
        %p544 = scmp.lt.s32.totalorder %s31, 1
        %s545 = scalar_select %p544, %s31, 1
        %s546 = scalar_lea.vmem %s4, %s545
        %p547 = pneg %p163
        %p548 = pneg %p160
        %p549 = scmp.lt.s32.totalorder %s31, 1
        %s550 = scalar_select %p549, %s31, 1
        %s551 = scalar_lea.vmem %s5, %s550
        %p552 = pneg %p189
        %p553 = pneg %p186
        %p554 = scmp.lt.s32.totalorder %s31, 1
        %s555 = scalar_select %p554, %s31, 1
        %s556 = scalar_lea.vmem %s6, %s555
        %p557 = pneg %p215
        %p558 = pneg %p212
        %p559 = scmp.lt.s32.totalorder %s31, 1
        %s560 = scalar_select %p559, %s31, 1
        %s561 = smul.addr %s560, 4
        %s562 = smul.addr %s561, 8
        %s563 = scalar_lea.vmem %s7, %s562
        %p564 = pneg %p241
        %p565 = pneg %p238
        %p566 = scmp.lt.s32.totalorder %s31, 1
        %s567 = scalar_select %p566, %s31, 1
        %s568 = scalar_lea.vmem %s8, %s567
        %p569 = pneg %p267
        %p570 = pneg %p264
        %p571 = scmp.lt.s32.totalorder %s31, 1
        %s572 = scalar_select %p571, %s31, 1
        %s573 = smul.addr %s572, 8
        %s574 = smul.addr %s573, 8
        %s575 = scalar_lea.vmem %s9, %s574
        %p576 = pneg %p293
        %p577 = pneg %p290
        %p578 = scmp.lt.s32.totalorder %s31, 1
        %s579 = scalar_select %p578, %s31, 1
        %s580 = scalar_lea.vmem %s10, %s579
        %p581 = pneg %p319
        %p582 = pneg %p316
        %p583 = scmp.lt.s32.totalorder %s31, 1
        %s584 = scalar_select %p583, %s31, 1
        %s585 = scalar_lea.vmem %s11, %s584
        %p586 = pneg %p345
        %p587 = pneg %p342
        %p588 = scmp.lt.s32.totalorder %s31, 1
        %s589 = scalar_select %p588, %s31, 1
        %s590 = scalar_lea.vmem %s12, %s589
        %p591 = pneg %p371
        %p592 = pneg %p368
        %p593 = pneg %p397
        %p594 = pneg %p394
        %s595 = smul.u32 2, %s30
        %p596 = scmp.lt.s32.totalorder %s31, 1
        %s597 = scalar_select %p596, %s31, 1
        %s598 = smul.addr %s597, 4
        %s599 = smul.addr %s598, 8
        %s600 = scalar_lea.vmem %s1, %s599
        %p601 = scmp.lt.s32.totalorder %s31, 1
        %s602 = scalar_select %p601, %s31, 1
        %s603 = scalar_lea.vmem %s2, %s602
        %p604 = scmp.lt.s32.totalorder %s31, 1
        %s605 = scalar_select %p604, %s31, 1
        %s606 = smul.addr %s605, 4
        %s607 = smul.addr %s606, 8
        %s608 = scalar_lea.vmem %s3, %s607
        %p609 = scmp.lt.s32.totalorder %s31, 1
        %s610 = scalar_select %p609, %s31, 1
        %s611 = scalar_lea.vmem %s4, %s610
        %p612 = scmp.lt.s32.totalorder %s31, 1
        %s613 = scalar_select %p612, %s31, 1
        %s614 = scalar_lea.vmem %s5, %s613
        %p615 = scmp.lt.s32.totalorder %s31, 1
        %s616 = scalar_select %p615, %s31, 1
        %s617 = scalar_lea.vmem %s6, %s616
        %p618 = scmp.lt.s32.totalorder %s31, 1
        %s619 = scalar_select %p618, %s31, 1
        %s620 = smul.addr %s619, 4
        %s621 = smul.addr %s620, 8
        %s622 = scalar_lea.vmem %s7, %s621
        %p623 = scmp.lt.s32.totalorder %s31, 1
        %s624 = scalar_select %p623, %s31, 1
        %s625 = scalar_lea.vmem %s8, %s624
        %p626 = scmp.lt.s32.totalorder %s31, 1
        %s627 = scalar_select %p626, %s31, 1
        %s628 = smul.addr %s627, 8
        %s629 = smul.addr %s628, 8
        %s630 = scalar_lea.vmem %s9, %s629
        %p631 = scmp.lt.s32.totalorder %s31, 1
        %s632 = scalar_select %p631, %s31, 1
        %s633 = scalar_lea.vmem %s10, %s632
        %p634 = scmp.lt.s32.totalorder %s31, 1
        %s635 = scalar_select %p634, %s31, 1
        %s636 = scalar_lea.vmem %s11, %s635
        %p637 = scmp.lt.s32.totalorder %s31, 1
        %s638 = scalar_select %p637, %s31, 1
        %s639 = scalar_lea.vmem %s12, %s638
        %s640 = smul.u32 2, %s30
        %p641 = scmp.eq.s32.totalorder %s31, 0
        // Predicated region
        $region77: #{tpu_custom_call.1} parent=71 // pred_check
          %p642 = pneg %p641
        $region78: #{tpu_custom_call.1} parent=71 // pred_check_branch
          %644 = sbr.rel (%p642) target = $region80
        $region79: #{tpu_custom_call.1} parent=71 // pred_region
          %v645 = vld [vmem:[#allocation2] sm:$0xff]
          %v646 = vld [vmem:[#allocation2 + $0x8] sm:$0xff]
          %vm647 = vcmask 261120
          %648 = vst.msk [vmem:[#allocation5] sm:$0xff] %vm647, %v645
          %649 = vst.msk [vmem:[#allocation5 + $0x8] sm:$0xff] %vm647, %v646
        $region80: #{tpu_custom_call.1} parent=71 // pred_fallthru
          _
        %v650 = vld [vmem:[#allocation5] sm:$0xff]
        %v651 = vld [vmem:[#allocation5 + $0x8] sm:$0xff]
        %v652 = vld [vmem:[%s600] sm:$0xff]
        %v653 = vld [vmem:[%s600 + $0x8] sm:$0xff]
        %v654 = vld [vmem:[%s600 + $0x10] sm:$0xff]
        %v655 = vld [vmem:[%s600 + $0x18] sm:$0xff]
        %v656 = vld [vmem:[%s603] sm:$0x1]
        %v658 = vlaneseq
        %v659 = vshrl.u32 %v658, 7
        %v660 = vsub.s32 0, %v659
        %v661 = vrot.slane %v656, %v660
        %vm663 = vcmask 261120
        %v665 = vsel %vm663, %v650, 0
        %v668 = vsel %vm663, %v651, 0
        %670 = vmatprep.subr.mxu0 0.0
        %671 = vmatpush1.msra.mxu0 %v652
        %672 = vmatprep.subr.mxu0 0.0
        %673 = vmatpush1.msra.mxu0 %v653
        %674 = vmatprep.subr.mxu0 0.0
        %675 = vmatpush1.msra.mxu0 %v654
        %676 = vmatprep.subr.mxu0 0.0
        %677 = vmatpush1.msra.mxu0 %v655
        %678 = vmatprep.subr.mxu0 0.0
        %679 = vmatpush1.msra.mxu0 0.0
        %680 = vmatprep.subr.mxu0 0.0
        %681 = vmatpush1.msra.mxu0 0.0
        %682 = vmatprep.subr.mxu0 0.0
        %683 = vmatpush1.msra.mxu0 0.0
        %684 = vmatprep.subr.mxu0 0.0
        %685 = vmatpush1.msra.mxu0 0.0
        %686 = vmatprep.subr.mxu0 0.0
        %687 = vmatpush1.msra.mxu0 0.0
        %688 = vmatprep.subr.mxu0 0.0
        %689 = vmatpush1.msra.mxu0 0.0
        %690 = vmatprep.subr.mxu0 0.0
        %691 = vmatpush1.msra.mxu0 0.0
        %692 = vmatprep.subr.mxu0 0.0
        %693 = vmatpush1.msra.mxu0 0.0
        %694 = vmatprep.subr.mxu0 0.0
        %695 = vmatpush1.msra.mxu0 0.0
        %696 = vmatprep.subr.mxu0 0.0
        %697 = vmatpush1.msra.mxu0 0.0
        %698 = vmatprep.subr.mxu0 0.0
        %699 = vmatpush1.msra.mxu0 0.0
        %700 = vmatprep.subr.mxu0 0.0
        %701 = vmatpush1.msra.mxu0 0.0
        %702 = vmatprep.subr.mxu0 0.0
        %703 = vmatpush1.msra.mxu0 0.0
        %704 = vmatprep.subr.mxu0 0.0
        %705 = vmatpush1.msra.mxu0 0.0
        %706 = vmatprep.subr.mxu0 0.0
        %707 = vmatpush1.msra.mxu0 0.0
        %708 = vmatprep.subr.mxu0 0.0
        %709 = vmatpush1.msra.mxu0 0.0
        %710 = vmatprep.subr.mxu0 0.0
        %711 = vmatpush1.msra.mxu0 0.0
        %712 = vmatprep.subr.mxu0 0.0
        %713 = vmatpush1.msra.mxu0 0.0
        %714 = vmatprep.subr.mxu0 0.0
        %715 = vmatpush1.msra.mxu0 0.0
        %716 = vmatprep.subr.mxu0 0.0
        %717 = vmatpush1.msra.mxu0 0.0
        %718 = vmatprep.subr.mxu0 0.0
        %719 = vmatpush1.msra.mxu0 0.0
        %720 = vmatprep.subr.mxu0 0.0
        %721 = vmatpush1.msra.mxu0 0.0
        %722 = vmatprep.subr.mxu0 0.0
        %723 = vmatpush1.msra.mxu0 0.0
        %724 = vmatprep.subr.mxu0 0.0
        %725 = vmatpush1.msra.mxu0 0.0
        %726 = vmatprep.subr.mxu0 0.0
        %727 = vmatpush1.msra.mxu0 0.0
        %728 = vmatprep.subr.mxu0 0.0
        %729 = vmatpush1.msra.mxu0 0.0
        %730 = vmatprep.subr.mxu0 0.0
        %731 = vmatpush1.msra.mxu0 0.0
        %732 = vmatprep.subr.mxu0 0.0
        %733 = vmatpush1.msra.mxu0 0.0
        %734 = vmatprep.mubr.f32.mxu0 0.0
        %735 = vmatmul.mubr.f32.gmra.mrb[0].mxu0 %v665
        %v736 = vpop.f32.mrb[0].mxu0
        %v737 = vadd.f32 %v661, %v736
        %v738 = vpop.f32.mrb[0].mxu0
        %739 = vmatprep.mubr.f32.mxu0 0.0
        %740 = vmatmul.mubr.f32.gmra.mrb[0].mxu0 %v668
        %v741 = vpop.f32.mrb[0].mxu0
        %v742 = vadd.f32 %v661, %v741
        %v743 = vpop.f32.mrb[0].mxu0
        %744 = vdwg.mxu0
        %747 = vrot.lane.b32.xlu0 %v737, 120
        %v748 = vpop.permute.xlu0 %747
        %749 = vrot.lane.b32.xlu0 %v742, 120
        %v750 = vpop.permute.xlu0 %749
        %751 = vrot.lane.b32.xlu0 %v737, 112
        %v752 = vpop.permute.xlu0 %751
        %753 = vrot.lane.b32.xlu0 %v742, 112
        %v754 = vpop.permute.xlu0 %753
        %755 = vrot.lane.b32.xlu0 %v737, 104
        %v756 = vpop.permute.xlu0 %755
        %757 = vrot.lane.b32.xlu0 %v742, 104
        %v758 = vpop.permute.xlu0 %757
        %759 = vrot.lane.b32.xlu0 %v737, 96
        %v760 = vpop.permute.xlu0 %759
        %vm761 = vcmask 64512
        %v762 = vsel %vm761, %v737, 0
        %v764 = vsel %vm761, %v760, 0
        %766 = vmatprep.subr.mxu0 0.0
        %767 = vmatpush1.xpose.msra.mxu0 %v764
        %768 = vmatprep.subr.mxu0 0.0
        %769 = vmatpush1.xpose.msra.mxu0 0.0
        %770 = vmatprep.subr.mxu0 0.0
        %771 = vmatpush1.xpose.msra.mxu0 0.0
        %772 = vmatprep.subr.mxu0 0.0
        %773 = vmatpush1.xpose.msra.mxu0 0.0
        %774 = vmatprep.subr.mxu0 0.0
        %775 = vmatpush1.xpose.msra.mxu0 0.0
        %776 = vmatprep.subr.mxu0 0.0
        %777 = vmatpush1.xpose.msra.mxu0 0.0
        %778 = vmatprep.subr.mxu0 0.0
        %779 = vmatpush1.xpose.msra.mxu0 0.0
        %780 = vmatprep.subr.mxu0 0.0
        %781 = vmatpush1.xpose.msra.mxu0 0.0
        %782 = vmatprep.subr.mxu0 0.0
        %783 = vmatpush1.xpose.msra.mxu0 0.0
        %784 = vmatprep.subr.mxu0 0.0
        %785 = vmatpush1.xpose.msra.mxu0 0.0
        %786 = vmatprep.subr.mxu0 0.0
        %787 = vmatpush1.xpose.msra.mxu0 0.0
        %788 = vmatprep.subr.mxu0 0.0
        %789 = vmatpush1.xpose.msra.mxu0 0.0
        %790 = vmatprep.subr.mxu0 0.0
        %791 = vmatpush1.xpose.msra.mxu0 0.0
        %792 = vmatprep.subr.mxu0 0.0
        %793 = vmatpush1.xpose.msra.mxu0 0.0
        %794 = vmatprep.subr.mxu0 0.0
        %795 = vmatpush1.xpose.msra.mxu0 0.0
        %796 = vmatprep.subr.mxu0 0.0
        %797 = vmatpush1.xpose.msra.mxu0 0.0
        %798 = vmatprep.subr.mxu0 0.0
        %799 = vmatpush1.xpose.msra.mxu0 0.0
        %800 = vmatprep.subr.mxu0 0.0
        %801 = vmatpush1.xpose.msra.mxu0 0.0
        %802 = vmatprep.subr.mxu0 0.0
        %803 = vmatpush1.xpose.msra.mxu0 0.0
        %804 = vmatprep.subr.mxu0 0.0
        %805 = vmatpush1.xpose.msra.mxu0 0.0
        %806 = vmatprep.subr.mxu0 0.0
        %807 = vmatpush1.xpose.msra.mxu0 0.0
        %808 = vmatprep.subr.mxu0 0.0
        %809 = vmatpush1.xpose.msra.mxu0 0.0
        %810 = vmatprep.subr.mxu0 0.0
        %811 = vmatpush1.xpose.msra.mxu0 0.0
        %812 = vmatprep.subr.mxu0 0.0
        %813 = vmatpush1.xpose.msra.mxu0 0.0
        %814 = vmatprep.subr.mxu0 0.0
        %815 = vmatpush1.xpose.msra.mxu0 0.0
        %816 = vmatprep.subr.mxu0 0.0
        %817 = vmatpush1.xpose.msra.mxu0 0.0
        %818 = vmatprep.subr.mxu0 0.0
        %819 = vmatpush1.xpose.msra.mxu0 0.0
        %820 = vmatprep.subr.mxu0 0.0
        %821 = vmatpush1.xpose.msra.mxu0 0.0
        %822 = vmatprep.subr.mxu0 0.0
        %823 = vmatpush1.xpose.msra.mxu0 0.0
        %824 = vmatprep.subr.mxu0 0.0
        %825 = vmatpush1.xpose.msra.mxu0 0.0
        %826 = vmatprep.subr.mxu0 0.0
        %827 = vmatpush1.xpose.msra.mxu0 0.0
        %828 = vmatprep.subr.mxu0 0.0
        %829 = vmatpush1.xpose.msra.mxu0 0.0
        %830 = vmatprep.mubr.f32.mxu0 0.0
        %831 = vmatmul.mubr.f32.gmra.mrb[0].mxu0 %v762
        %v832 = vpop.f32.mrb[0].mxu0
        %v833 = vadd.f32 0.0, %v832
        %v834 = vpop.f32.mrb[0].mxu0
        %835 = vdwg.mxu0
        %836 = vrot.lane.b32.xlu0 %v742, 96
        %v837 = vpop.permute.xlu0 %836
        %v838 = vsel %vm761, %v742, 0
        %v840 = vsel %vm761, %v837, 0
        %842 = vmatprep.subr.mxu0 0.0
        %843 = vmatpush1.xpose.msra.mxu0 %v840
        %844 = vmatprep.subr.mxu0 0.0
        %845 = vmatpush1.xpose.msra.mxu0 0.0
        %846 = vmatprep.subr.mxu0 0.0
        %847 = vmatpush1.xpose.msra.mxu0 0.0
        %848 = vmatprep.subr.mxu0 0.0
        %849 = vmatpush1.xpose.msra.mxu0 0.0
        %850 = vmatprep.subr.mxu0 0.0
        %851 = vmatpush1.xpose.msra.mxu0 0.0
        %852 = vmatprep.subr.mxu0 0.0
        %853 = vmatpush1.xpose.msra.mxu0 0.0
        %854 = vmatprep.subr.mxu0 0.0
        %855 = vmatpush1.xpose.msra.mxu0 0.0
        %856 = vmatprep.subr.mxu0 0.0
        %857 = vmatpush1.xpose.msra.mxu0 0.0
        %858 = vmatprep.subr.mxu0 0.0
        %859 = vmatpush1.xpose.msra.mxu0 0.0
        %860 = vmatprep.subr.mxu0 0.0
        %861 = vmatpush1.xpose.msra.mxu0 0.0
        %862 = vmatprep.subr.mxu0 0.0
        %863 = vmatpush1.xpose.msra.mxu0 0.0
        %864 = vmatprep.subr.mxu0 0.0
        %865 = vmatpush1.xpose.msra.mxu0 0.0
        %866 = vmatprep.subr.mxu0 0.0
        %867 = vmatpush1.xpose.msra.mxu0 0.0
        %868 = vmatprep.subr.mxu0 0.0
        %869 = vmatpush1.xpose.msra.mxu0 0.0
        %870 = vmatprep.subr.mxu0 0.0
        %871 = vmatpush1.xpose.msra.mxu0 0.0
        %872 = vmatprep.subr.mxu0 0.0
        %873 = vmatpush1.xpose.msra.mxu0 0.0
        %874 = vmatprep.subr.mxu0 0.0
        %875 = vmatpush1.xpose.msra.mxu0 0.0
        %876 = vmatprep.subr.mxu0 0.0
        %877 = vmatpush1.xpose.msra.mxu0 0.0
        %878 = vmatprep.subr.mxu0 0.0
        %879 = vmatpush1.xpose.msra.mxu0 0.0
        %880 = vmatprep.subr.mxu0 0.0
        %881 = vmatpush1.xpose.msra.mxu0 0.0
        %882 = vmatprep.subr.mxu0 0.0
        %883 = vmatpush1.xpose.msra.mxu0 0.0
        %884 = vmatprep.subr.mxu0 0.0
        %885 = vmatpush1.xpose.msra.mxu0 0.0
        %886 = vmatprep.subr.mxu0 0.0
        %887 = vmatpush1.xpose.msra.mxu0 0.0
        %888 = vmatprep.subr.mxu0 0.0
        %889 = vmatpush1.xpose.msra.mxu0 0.0
        %890 = vmatprep.subr.mxu0 0.0
        %891 = vmatpush1.xpose.msra.mxu0 0.0
        %892 = vmatprep.subr.mxu0 0.0
        %893 = vmatpush1.xpose.msra.mxu0 0.0
        %894 = vmatprep.subr.mxu0 0.0
        %895 = vmatpush1.xpose.msra.mxu0 0.0
        %896 = vmatprep.subr.mxu0 0.0
        %897 = vmatpush1.xpose.msra.mxu0 0.0
        %898 = vmatprep.subr.mxu0 0.0
        %899 = vmatpush1.xpose.msra.mxu0 0.0
        %900 = vmatprep.subr.mxu0 0.0
        %901 = vmatpush1.xpose.msra.mxu0 0.0
        %902 = vmatprep.subr.mxu0 0.0
        %903 = vmatpush1.xpose.msra.mxu0 0.0
        %904 = vmatprep.subr.mxu0 0.0
        %905 = vmatpush1.xpose.msra.mxu0 0.0
        %906 = vmatprep.mubr.f32.mxu0 0.0
        %907 = vmatmul.mubr.f32.gmra.mrb[0].mxu0 %v838
        %v908 = vpop.f32.mrb[0].mxu0
        %v909 = vadd.f32 0.0, %v908
        %v910 = vpop.f32.mrb[0].mxu0
        %911 = vdwg.mxu0
        %912 = vrot.lane.b32.xlu0 %v748, 96
        %v913 = vpop.permute.xlu0 %912
        %v914 = vsel %vm761, %v748, 0
        %v916 = vsel %vm761, %v913, 0
        %918 = vmatprep.subr.mxu0 0.0
        %919 = vmatpush1.xpose.msra.mxu0 %v916
        %920 = vmatprep.subr.mxu0 0.0
        %921 = vmatpush1.xpose.msra.mxu0 0.0
        %922 = vmatprep.subr.mxu0 0.0
        %923 = vmatpush1.xpose.msra.mxu0 0.0
        %924 = vmatprep.subr.mxu0 0.0
        %925 = vmatpush1.xpose.msra.mxu0 0.0
        %926 = vmatprep.subr.mxu0 0.0
        %927 = vmatpush1.xpose.msra.mxu0 0.0
        %928 = vmatprep.subr.mxu0 0.0
        %929 = vmatpush1.xpose.msra.mxu0 0.0
        %930 = vmatprep.subr.mxu0 0.0
        %931 = vmatpush1.xpose.msra.mxu0 0.0
        %932 = vmatprep.subr.mxu0 0.0
        %933 = vmatpush1.xpose.msra.mxu0 0.0
        %934 = vmatprep.subr.mxu0 0.0
        %935 = vmatpush1.xpose.msra.mxu0 0.0
        %936 = vmatprep.subr.mxu0 0.0
        %937 = vmatpush1.xpose.msra.mxu0 0.0
        %938 = vmatprep.subr.mxu0 0.0
        %939 = vmatpush1.xpose.msra.mxu0 0.0
        %940 = vmatprep.subr.mxu0 0.0
        %941 = vmatpush1.xpose.msra.mxu0 0.0
        %942 = vmatprep.subr.mxu0 0.0
        %943 = vmatpush1.xpose.msra.mxu0 0.0
        %944 = vmatprep.subr.mxu0 0.0
        %945 = vmatpush1.xpose.msra.mxu0 0.0
        %946 = vmatprep.subr.mxu0 0.0
        %947 = vmatpush1.xpose.msra.mxu0 0.0
        %948 = vmatprep.subr.mxu0 0.0
        %949 = vmatpush1.xpose.msra.mxu0 0.0
        %950 = vmatprep.subr.mxu0 0.0
        %951 = vmatpush1.xpose.msra.mxu0 0.0
        %952 = vmatprep.subr.mxu0 0.0
        %953 = vmatpush1.xpose.msra.mxu0 0.0
        %954 = vmatprep.subr.mxu0 0.0
        %955 = vmatpush1.xpose.msra.mxu0 0.0
        %956 = vmatprep.subr.mxu0 0.0
        %957 = vmatpush1.xpose.msra.mxu0 0.0
        %958 = vmatprep.subr.mxu0 0.0
        %959 = vmatpush1.xpose.msra.mxu0 0.0
        %960 = vmatprep.subr.mxu0 0.0
        %961 = vmatpush1.xpose.msra.mxu0 0.0
        %962 = vmatprep.subr.mxu0 0.0
        %963 = vmatpush1.xpose.msra.mxu0 0.0
        %964 = vmatprep.subr.mxu0 0.0
        %965 = vmatpush1.xpose.msra.mxu0 0.0
        %966 = vmatprep.subr.mxu0 0.0
        %967 = vmatpush1.xpose.msra.mxu0 0.0
        %968 = vmatprep.subr.mxu0 0.0
        %969 = vmatpush1.xpose.msra.mxu0 0.0
        %970 = vmatprep.subr.mxu0 0.0
        %971 = vmatpush1.xpose.msra.mxu0 0.0
        %972 = vmatprep.subr.mxu0 0.0
        %973 = vmatpush1.xpose.msra.mxu0 0.0
        %974 = vmatprep.subr.mxu0 0.0
        %975 = vmatpush1.xpose.msra.mxu0 0.0
        %976 = vmatprep.subr.mxu0 0.0
        %977 = vmatpush1.xpose.msra.mxu0 0.0
        %978 = vmatprep.subr.mxu0 0.0
        %979 = vmatpush1.xpose.msra.mxu0 0.0
        %980 = vmatprep.subr.mxu0 0.0
        %981 = vmatpush1.xpose.msra.mxu0 0.0
        %982 = vmatprep.mubr.f32.mxu0 0.0
        %983 = vmatmul.mubr.f32.gmra.mrb[0].mxu0 %v914
        %v984 = vpop.f32.mrb[0].mxu0
        %v985 = vadd.f32 0.0, %v984
        %v986 = vpop.f32.mrb[0].mxu0
        %987 = vdwg.mxu0
        %988 = vrot.lane.b32.xlu0 %v750, 96
        %v989 = vpop.permute.xlu0 %988
        %v990 = vsel %vm761, %v750, 0
        %v992 = vsel %vm761, %v989, 0
        %994 = vmatprep.subr.mxu0 0.0
        %995 = vmatpush1.xpose.msra.mxu0 %v992
        %996 = vmatprep.subr.mxu0 0.0
        %997 = vmatpush1.xpose.msra.mxu0 0.0
        %998 = vmatprep.subr.mxu0 0.0
        %999 = vmatpush1.xpose.msra.mxu0 0.0
        %1000 = vmatprep.subr.mxu0 0.0
        %1001 = vmatpush1.xpose.msra.mxu0 0.0
        %1002 = vmatprep.subr.mxu0 0.0
        %1003 = vmatpush1.xpose.msra.mxu0 0.0
        %1004 = vmatprep.subr.mxu0 0.0
        %1005 = vmatpush1.xpose.msra.mxu0 0.0
        %1006 = vmatprep.subr.mxu0 0.0
        %1007 = vmatpush1.xpose.msra.mxu0 0.0
        %1008 = vmatprep.subr.mxu0 0.0
        %1009 = vmatpush1.xpose.msra.mxu0 0.0
        %1010 = vmatprep.subr.mxu0 0.0
        %1011 = vmatpush1.xpose.msra.mxu0 0.0
        %1012 = vmatprep.subr.mxu0 0.0
        %1013 = vmatpush1.xpose.msra.mxu0 0.0
        %1014 = vmatprep.subr.mxu0 0.0
        %1015 = vmatpush1.xpose.msra.mxu0 0.0
        %1016 = vmatprep.subr.mxu0 0.0
        %1017 = vmatpush1.xpose.msra.mxu0 0.0
        %1018 = vmatprep.subr.mxu0 0.0
        %1019 = vmatpush1.xpose.msra.mxu0 0.0
        %1020 = vmatprep.subr.mxu0 0.0
        %1021 = vmatpush1.xpose.msra.mxu0 0.0
        %1022 = vmatprep.subr.mxu0 0.0
        %1023 = vmatpush1.xpose.msra.mxu0 0.0
        %1024 = vmatprep.subr.mxu0 0.0
        %1025 = vmatpush1.xpose.msra.mxu0 0.0
        %1026 = vmatprep.subr.mxu0 0.0
        %1027 = vmatpush1.xpose.msra.mxu0 0.0
        %1028 = vmatprep.subr.mxu0 0.0
        %1029 = vmatpush1.xpose.msra.mxu0 0.0
        %1030 = vmatprep.subr.mxu0 0.0
        %1031 = vmatpush1.xpose.msra.mxu0 0.0
        %1032 = vmatprep.subr.mxu0 0.0
        %1033 = vmatpush1.xpose.msra.mxu0 0.0
        %1034 = vmatprep.subr.mxu0 0.0
        %1035 = vmatpush1.xpose.msra.mxu0 0.0
        %1036 = vmatprep.subr.mxu0 0.0
        %1037 = vmatpush1.xpose.msra.mxu0 0.0
        %1038 = vmatprep.subr.mxu0 0.0
        %1039 = vmatpush1.xpose.msra.mxu0 0.0
        %1040 = vmatprep.subr.mxu0 0.0
        %1041 = vmatpush1.xpose.msra.mxu0 0.0
        %1042 = vmatprep.subr.mxu0 0.0
        %1043 = vmatpush1.xpose.msra.mxu0 0.0
        %1044 = vmatprep.subr.mxu0 0.0
        %1045 = vmatpush1.xpose.msra.mxu0 0.0
        %1046 = vmatprep.subr.mxu0 0.0
        %1047 = vmatpush1.xpose.msra.mxu0 0.0
        %1048 = vmatprep.subr.mxu0 0.0
        %1049 = vmatpush1.xpose.msra.mxu0 0.0
        %1050 = vmatprep.subr.mxu0 0.0
        %1051 = vmatpush1.xpose.msra.mxu0 0.0
        %1052 = vmatprep.subr.mxu0 0.0
        %1053 = vmatpush1.xpose.msra.mxu0 0.0
        %1054 = vmatprep.subr.mxu0 0.0
        %1055 = vmatpush1.xpose.msra.mxu0 0.0
        %1056 = vmatprep.subr.mxu0 0.0
        %1057 = vmatpush1.xpose.msra.mxu0 0.0
        %1058 = vmatprep.mubr.f32.mxu0 0.0
        %1059 = vmatmul.mubr.f32.gmra.mrb[0].mxu0 %v990
        %v1060 = vpop.f32.mrb[0].mxu0
        %v1061 = vadd.f32 0.0, %v1060
        %v1062 = vpop.f32.mrb[0].mxu0
        %1063 = vdwg.mxu0
        %1064 = vrot.lane.b32.xlu0 %v752, 96
        %v1065 = vpop.permute.xlu0 %1064
        %v1066 = vsel %vm761, %v752, 0
        %v1068 = vsel %vm761, %v1065, 0
        %1070 = vmatprep.subr.mxu0 0.0
        %1071 = vmatpush1.xpose.msra.mxu0 %v1068
        %1072 = vmatprep.subr.mxu0 0.0
        %1073 = vmatpush1.xpose.msra.mxu0 0.0
        %1074 = vmatprep.subr.mxu0 0.0
        %1075 = vmatpush1.xpose.msra.mxu0 0.0
        %1076 = vmatprep.subr.mxu0 0.0
        %1077 = vmatpush1.xpose.msra.mxu0 0.0
        %1078 = vmatprep.subr.mxu0 0.0
        %1079 = vmatpush1.xpose.msra.mxu0 0.0
        %1080 = vmatprep.subr.mxu0 0.0
        %1081 = vmatpush1.xpose.msra.mxu0 0.0
        %1082 = vmatprep.subr.mxu0 0.0
        %1083 = vmatpush1.xpose.msra.mxu0 0.0
        %1084 = vmatprep.subr.mxu0 0.0
        %1085 = vmatpush1.xpose.msra.mxu0 0.0
        %1086 = vmatprep.subr.mxu0 0.0
        %1087 = vmatpush1.xpose.msra.mxu0 0.0
        %1088 = vmatprep.subr.mxu0 0.0
        %1089 = vmatpush1.xpose.msra.mxu0 0.0
        %1090 = vmatprep.subr.mxu0 0.0
        %1091 = vmatpush1.xpose.msra.mxu0 0.0
        %1092 = vmatprep.subr.mxu0 0.0
        %1093 = vmatpush1.xpose.msra.mxu0 0.0
        %1094 = vmatprep.subr.mxu0 0.0
        %1095 = vmatpush1.xpose.msra.mxu0 0.0
        %1096 = vmatprep.subr.mxu0 0.0
        %1097 = vmatpush1.xpose.msra.mxu0 0.0
        %1098 = vmatprep.subr.mxu0 0.0
        %1099 = vmatpush1.xpose.msra.mxu0 0.0
        %1100 = vmatprep.subr.mxu0 0.0
        %1101 = vmatpush1.xpose.msra.mxu0 0.0
        %1102 = vmatprep.subr.mxu0 0.0
        %1103 = vmatpush1.xpose.msra.mxu0 0.0
        %1104 = vmatprep.subr.mxu0 0.0
        %1105 = vmatpush1.xpose.msra.mxu0 0.0
        %1106 = vmatprep.subr.mxu0 0.0
        %1107 = vmatpush1.xpose.msra.mxu0 0.0
        %1108 = vmatprep.subr.mxu0 0.0
        %1109 = vmatpush1.xpose.msra.mxu0 0.0
        %1110 = vmatprep.subr.mxu0 0.0
        %1111 = vmatpush1.xpose.msra.mxu0 0.0
        %1112 = vmatprep.subr.mxu0 0.0
        %1113 = vmatpush1.xpose.msra.mxu0 0.0
        %1114 = vmatprep.subr.mxu0 0.0
        %1115 = vmatpush1.xpose.msra.mxu0 0.0
        %1116 = vmatprep.subr.mxu0 0.0
        %1117 = vmatpush1.xpose.msra.mxu0 0.0
        %1118 = vmatprep.subr.mxu0 0.0
        %1119 = vmatpush1.xpose.msra.mxu0 0.0
        %1120 = vmatprep.subr.mxu0 0.0
        %1121 = vmatpush1.xpose.msra.mxu0 0.0
        %1122 = vmatprep.subr.mxu0 0.0
        %1123 = vmatpush1.xpose.msra.mxu0 0.0
        %1124 = vmatprep.subr.mxu0 0.0
        %1125 = vmatpush1.xpose.msra.mxu0 0.0
        %1126 = vmatprep.subr.mxu0 0.0
        %1127 = vmatpush1.xpose.msra.mxu0 0.0
        %1128 = vmatprep.subr.mxu0 0.0
        %1129 = vmatpush1.xpose.msra.mxu0 0.0
        %1130 = vmatprep.subr.mxu0 0.0
        %1131 = vmatpush1.xpose.msra.mxu0 0.0
        %1132 = vmatprep.subr.mxu0 0.0
        %1133 = vmatpush1.xpose.msra.mxu0 0.0
        %1134 = vmatprep.mubr.f32.mxu0 0.0
        %1135 = vmatmul.mubr.f32.gmra.mrb[0].mxu0 %v1066
        %v1136 = vpop.f32.mrb[0].mxu0
        %v1137 = vadd.f32 0.0, %v1136
        %v1138 = vpop.f32.mrb[0].mxu0
        %1139 = vdwg.mxu0
        %1140 = vrot.lane.b32.xlu0 %v754, 96
        %v1141 = vpop.permute.xlu0 %1140
        %v1142 = vsel %vm761, %v754, 0
        %v1144 = vsel %vm761, %v1141, 0
        %1146 = vmatprep.subr.mxu0 0.0
        %1147 = vmatpush1.xpose.msra.mxu0 %v1144
        %1148 = vmatprep.subr.mxu0 0.0
        %1149 = vmatpush1.xpose.msra.mxu0 0.0
        %1150 = vmatprep.subr.mxu0 0.0
        %1151 = vmatpush1.xpose.msra.mxu0 0.0
        %1152 = vmatprep.subr.mxu0 0.0
        %1153 = vmatpush1.xpose.msra.mxu0 0.0
        %1154 = vmatprep.subr.mxu0 0.0
        %1155 = vmatpush1.xpose.msra.mxu0 0.0
        %1156 = vmatprep.subr.mxu0 0.0
        %1157 = vmatpush1.xpose.msra.mxu0 0.0
        %1158 = vmatprep.subr.mxu0 0.0
        %1159 = vmatpush1.xpose.msra.mxu0 0.0
        %1160 = vmatprep.subr.mxu0 0.0
        %1161 = vmatpush1.xpose.msra.mxu0 0.0
        %1162 = vmatprep.subr.mxu0 0.0
        %1163 = vmatpush1.xpose.msra.mxu0 0.0
        %1164 = vmatprep.subr.mxu0 0.0
        %1165 = vmatpush1.xpose.msra.mxu0 0.0
        %1166 = vmatprep.subr.mxu0 0.0
        %1167 = vmatpush1.xpose.msra.mxu0 0.0
        %1168 = vmatprep.subr.mxu0 0.0
        %1169 = vmatpush1.xpose.msra.mxu0 0.0
        %1170 = vmatprep.subr.mxu0 0.0
        %1171 = vmatpush1.xpose.msra.mxu0 0.0
        %1172 = vmatprep.subr.mxu0 0.0
        %1173 = vmatpush1.xpose.msra.mxu0 0.0
        %1174 = vmatprep.subr.mxu0 0.0
        %1175 = vmatpush1.xpose.msra.mxu0 0.0
        %1176 = vmatprep.subr.mxu0 0.0
        %1177 = vmatpush1.xpose.msra.mxu0 0.0
        %1178 = vmatprep.subr.mxu0 0.0
        %1179 = vmatpush1.xpose.msra.mxu0 0.0
        %1180 = vmatprep.subr.mxu0 0.0
        %1181 = vmatpush1.xpose.msra.mxu0 0.0
        %1182 = vmatprep.subr.mxu0 0.0
        %1183 = vmatpush1.xpose.msra.mxu0 0.0
        %1184 = vmatprep.subr.mxu0 0.0
        %1185 = vmatpush1.xpose.msra.mxu0 0.0
        %1186 = vmatprep.subr.mxu0 0.0
        %1187 = vmatpush1.xpose.msra.mxu0 0.0
        %1188 = vmatprep.subr.mxu0 0.0
        %1189 = vmatpush1.xpose.msra.mxu0 0.0
        %1190 = vmatprep.subr.mxu0 0.0
        %1191 = vmatpush1.xpose.msra.mxu0 0.0
        %1192 = vmatprep.subr.mxu0 0.0
        %1193 = vmatpush1.xpose.msra.mxu0 0.0
        %1194 = vmatprep.subr.mxu0 0.0
        %1195 = vmatpush1.xpose.msra.mxu0 0.0
        %1196 = vmatprep.subr.mxu0 0.0
        %1197 = vmatpush1.xpose.msra.mxu0 0.0
        %1198 = vmatprep.subr.mxu0 0.0
        %1199 = vmatpush1.xpose.msra.mxu0 0.0
        %1200 = vmatprep.subr.mxu0 0.0
        %1201 = vmatpush1.xpose.msra.mxu0 0.0
        %1202 = vmatprep.subr.mxu0 0.0
        %1203 = vmatpush1.xpose.msra.mxu0 0.0
        %1204 = vmatprep.subr.mxu0 0.0
        %1205 = vmatpush1.xpose.msra.mxu0 0.0
        %1206 = vmatprep.subr.mxu0 0.0
        %1207 = vmatpush1.xpose.msra.mxu0 0.0
        %1208 = vmatprep.subr.mxu0 0.0
        %1209 = vmatpush1.xpose.msra.mxu0 0.0
        %1210 = vmatprep.mubr.f32.mxu0 0.0
        %1211 = vmatmul.mubr.f32.gmra.mrb[0].mxu0 %v1142
        %v1212 = vpop.f32.mrb[0].mxu0
        %v1213 = vadd.f32 0.0, %v1212
        %v1214 = vpop.f32.mrb[0].mxu0
        %1215 = vdwg.mxu0
        %1216 = vrot.lane.b32.xlu0 %v756, 96
        %v1217 = vpop.permute.xlu0 %1216
        %v1218 = vsel %vm761, %v756, 0
        %v1220 = vsel %vm761, %v1217, 0
        %1222 = vmatprep.subr.mxu0 0.0
        %1223 = vmatpush1.xpose.msra.mxu0 %v1220
        %1224 = vmatprep.subr.mxu0 0.0
        %1225 = vmatpush1.xpose.msra.mxu0 0.0
        %1226 = vmatprep.subr.mxu0 0.0
        %1227 = vmatpush1.xpose.msra.mxu0 0.0
        %1228 = vmatprep.subr.mxu0 0.0
        %1229 = vmatpush1.xpose.msra.mxu0 0.0
        %1230 = vmatprep.subr.mxu0 0.0
        %1231 = vmatpush1.xpose.msra.mxu0 0.0
        %1232 = vmatprep.subr.mxu0 0.0
        %1233 = vmatpush1.xpose.msra.mxu0 0.0
        %1234 = vmatprep.subr.mxu0 0.0
        %1235 = vmatpush1.xpose.msra.mxu0 0.0
        %1236 = vmatprep.subr.mxu0 0.0
        %1237 = vmatpush1.xpose.msra.mxu0 0.0
        %1238 = vmatprep.subr.mxu0 0.0
        %1239 = vmatpush1.xpose.msra.mxu0 0.0
        %1240 = vmatprep.subr.mxu0 0.0
        %1241 = vmatpush1.xpose.msra.mxu0 0.0
        %1242 = vmatprep.subr.mxu0 0.0
        %1243 = vmatpush1.xpose.msra.mxu0 0.0
        %1244 = vmatprep.subr.mxu0 0.0
        %1245 = vmatpush1.xpose.msra.mxu0 0.0
        %1246 = vmatprep.subr.mxu0 0.0
        %1247 = vmatpush1.xpose.msra.mxu0 0.0
        %1248 = vmatprep.subr.mxu0 0.0
        %1249 = vmatpush1.xpose.msra.mxu0 0.0
        %1250 = vmatprep.subr.mxu0 0.0
        %1251 = vmatpush1.xpose.msra.mxu0 0.0
        %1252 = vmatprep.subr.mxu0 0.0
        %1253 = vmatpush1.xpose.msra.mxu0 0.0
        %1254 = vmatprep.subr.mxu0 0.0
        %1255 = vmatpush1.xpose.msra.mxu0 0.0
        %1256 = vmatprep.subr.mxu0 0.0
        %1257 = vmatpush1.xpose.msra.mxu0 0.0
        %1258 = vmatprep.subr.mxu0 0.0
        %1259 = vmatpush1.xpose.msra.mxu0 0.0
        %1260 = vmatprep.subr.mxu0 0.0
        %1261 = vmatpush1.xpose.msra.mxu0 0.0
        %1262 = vmatprep.subr.mxu0 0.0
        %1263 = vmatpush1.xpose.msra.mxu0 0.0
        %1264 = vmatprep.subr.mxu0 0.0
        %1265 = vmatpush1.xpose.msra.mxu0 0.0
        %1266 = vmatprep.subr.mxu0 0.0
        %1267 = vmatpush1.xpose.msra.mxu0 0.0
        %1268 = vmatprep.subr.mxu0 0.0
        %1269 = vmatpush1.xpose.msra.mxu0 0.0
        %1270 = vmatprep.subr.mxu0 0.0
        %1271 = vmatpush1.xpose.msra.mxu0 0.0
        %1272 = vmatprep.subr.mxu0 0.0
        %1273 = vmatpush1.xpose.msra.mxu0 0.0
        %1274 = vmatprep.subr.mxu0 0.0
        %1275 = vmatpush1.xpose.msra.mxu0 0.0
        %1276 = vmatprep.subr.mxu0 0.0
        %1277 = vmatpush1.xpose.msra.mxu0 0.0
        %1278 = vmatprep.subr.mxu0 0.0
        %1279 = vmatpush1.xpose.msra.mxu0 0.0
        %1280 = vmatprep.subr.mxu0 0.0
        %1281 = vmatpush1.xpose.msra.mxu0 0.0
        %1282 = vmatprep.subr.mxu0 0.0
        %1283 = vmatpush1.xpose.msra.mxu0 0.0
        %1284 = vmatprep.subr.mxu0 0.0
        %1285 = vmatpush1.xpose.msra.mxu0 0.0
        %1286 = vmatprep.mubr.f32.mxu0 0.0
        %1287 = vmatmul.mubr.f32.gmra.mrb[0].mxu0 %v1218
        %v1288 = vpop.f32.mrb[0].mxu0
        %v1289 = vadd.f32 0.0, %v1288
        %v1290 = vpop.f32.mrb[0].mxu0
        %1291 = vdwg.mxu0
        %1292 = vrot.lane.b32.xlu0 %v758, 96
        %v1293 = vpop.permute.xlu0 %1292
        %v1294 = vsel %vm761, %v758, 0
        %v1296 = vsel %vm761, %v1293, 0
        %1298 = vmatprep.subr.mxu0 0.0
        %1299 = vmatpush1.xpose.msra.mxu0 %v1296
        %1300 = vmatprep.subr.mxu0 0.0
        %1301 = vmatpush1.xpose.msra.mxu0 0.0
        %1302 = vmatprep.subr.mxu0 0.0
        %1303 = vmatpush1.xpose.msra.mxu0 0.0
        %1304 = vmatprep.subr.mxu0 0.0
        %1305 = vmatpush1.xpose.msra.mxu0 0.0
        %1306 = vmatprep.subr.mxu0 0.0
        %1307 = vmatpush1.xpose.msra.mxu0 0.0
        %1308 = vmatprep.subr.mxu0 0.0
        %1309 = vmatpush1.xpose.msra.mxu0 0.0
        %1310 = vmatprep.subr.mxu0 0.0
        %1311 = vmatpush1.xpose.msra.mxu0 0.0
        %1312 = vmatprep.subr.mxu0 0.0
        %1313 = vmatpush1.xpose.msra.mxu0 0.0
        %1314 = vmatprep.subr.mxu0 0.0
        %1315 = vmatpush1.xpose.msra.mxu0 0.0
        %1316 = vmatprep.subr.mxu0 0.0
        %1317 = vmatpush1.xpose.msra.mxu0 0.0
        %1318 = vmatprep.subr.mxu0 0.0
        %1319 = vmatpush1.xpose.msra.mxu0 0.0
        %1320 = vmatprep.subr.mxu0 0.0
        %1321 = vmatpush1.xpose.msra.mxu0 0.0
        %1322 = vmatprep.subr.mxu0 0.0
        %1323 = vmatpush1.xpose.msra.mxu0 0.0
        %1324 = vmatprep.subr.mxu0 0.0
        %1325 = vmatpush1.xpose.msra.mxu0 0.0
        %1326 = vmatprep.subr.mxu0 0.0
        %1327 = vmatpush1.xpose.msra.mxu0 0.0
        %1328 = vmatprep.subr.mxu0 0.0
        %1329 = vmatpush1.xpose.msra.mxu0 0.0
        %1330 = vmatprep.subr.mxu0 0.0
        %1331 = vmatpush1.xpose.msra.mxu0 0.0
        %1332 = vmatprep.subr.mxu0 0.0
        %1333 = vmatpush1.xpose.msra.mxu0 0.0
        %1334 = vmatprep.subr.mxu0 0.0
        %1335 = vmatpush1.xpose.msra.mxu0 0.0
        %1336 = vmatprep.subr.mxu0 0.0
        %1337 = vmatpush1.xpose.msra.mxu0 0.0
        %1338 = vmatprep.subr.mxu0 0.0
        %1339 = vmatpush1.xpose.msra.mxu0 0.0
        %1340 = vmatprep.subr.mxu0 0.0
        %1341 = vmatpush1.xpose.msra.mxu0 0.0
        %1342 = vmatprep.subr.mxu0 0.0
        %1343 = vmatpush1.xpose.msra.mxu0 0.0
        %1344 = vmatprep.subr.mxu0 0.0
        %1345 = vmatpush1.xpose.msra.mxu0 0.0
        %1346 = vmatprep.subr.mxu0 0.0
        %1347 = vmatpush1.xpose.msra.mxu0 0.0
        %1348 = vmatprep.subr.mxu0 0.0
        %1349 = vmatpush1.xpose.msra.mxu0 0.0
        %1350 = vmatprep.subr.mxu0 0.0
        %1351 = vmatpush1.xpose.msra.mxu0 0.0
        %1352 = vmatprep.subr.mxu0 0.0
        %1353 = vmatpush1.xpose.msra.mxu0 0.0
        %1354 = vmatprep.subr.mxu0 0.0
        %1355 = vmatpush1.xpose.msra.mxu0 0.0
        %1356 = vmatprep.subr.mxu0 0.0
        %1357 = vmatpush1.xpose.msra.mxu0 0.0
        %1358 = vmatprep.subr.mxu0 0.0
        %1359 = vmatpush1.xpose.msra.mxu0 0.0
        %1360 = vmatprep.subr.mxu0 0.0
        %1361 = vmatpush1.xpose.msra.mxu0 0.0
        %1362 = vmatprep.mubr.f32.mxu0 0.0
        %1363 = vmatmul.mubr.f32.gmra.mrb[0].mxu0 %v1294
        %v1364 = vpop.f32.mrb[0].mxu0
        %v1365 = vadd.f32 0.0, %v1364
        %v1366 = vpop.f32.mrb[0].mxu0
        %1367 = vdwg.mxu0
        %v1368 = vmul.f32 %v833, 0.35355338
        %v1369 = vmul.f32 %v909, 0.35355338
        %v1370 = vmul.f32 %v985, 0.35355338
        %v1371 = vmul.f32 %v1061, 0.35355338
        %v1372 = vmul.f32 %v1137, 0.35355338
        %v1373 = vmul.f32 %v1213, 0.35355338
        %v1374 = vmul.f32 %v1289, 0.35355338
        %v1375 = vmul.f32 %v1365, 0.35355338
        %v1376 = vsel %vm761, %v1368, -inf
        %1377 = vmax.xlane.f32.xlu0 %v1376
        %v1378 = vpop.xlane.xlu0 %1377
        %v1379 = vsel %vm761, %v1369, -inf
        %1380 = vmax.xlane.f32.xlu0 %v1379
        %v1381 = vpop.xlane.xlu0 %1380
        %v1382 = vsel %vm761, %v1370, -inf
        %1383 = vmax.xlane.f32.xlu0 %v1382
        %v1384 = vpop.xlane.xlu0 %1383
        %v1385 = vsel %vm761, %v1371, -inf
        %1386 = vmax.xlane.f32.xlu0 %v1385
        %v1387 = vpop.xlane.xlu0 %1386
        %v1388 = vsel %vm761, %v1372, -inf
        %1389 = vmax.xlane.f32.xlu0 %v1388
        %v1390 = vpop.xlane.xlu0 %1389
        %v1391 = vsel %vm761, %v1373, -inf
        %1392 = vmax.xlane.f32.xlu0 %v1391
        %v1393 = vpop.xlane.xlu0 %1392
        %v1394 = vsel %vm761, %v1374, -inf
        %1395 = vmax.xlane.f32.xlu0 %v1394
        %v1396 = vpop.xlane.xlu0 %1395
        %v1397 = vsel %vm761, %v1375, -inf
        %1398 = vmax.xlane.f32.xlu0 %v1397
        %v1399 = vpop.xlane.xlu0 %1398
        %v1400 = vsub.f32 %v1368, %v1378
        %v1401 = vsub.f32 %v1369, %v1381
        %v1402 = vsub.f32 %v1370, %v1384
        %v1403 = vsub.f32 %v1371, %v1387
        %v1404 = vsub.f32 %v1372, %v1390
        %v1405 = vsub.f32 %v1373, %v1393
        %v1406 = vsub.f32 %v1374, %v1396
        %v1407 = vsub.f32 %v1375, %v1399
        %v1408 = vmul.f32 %v1400, 1.442695
        %v1409 = vpow.pop %v1408
        %v1410 = vmul.f32 %v1401, 1.442695
        %v1411 = vpow.pop %v1410
        %v1412 = vmul.f32 %v1402, 1.442695
        %v1413 = vpow.pop %v1412
        %v1414 = vmul.f32 %v1403, 1.442695
        %v1415 = vpow.pop %v1414
        %v1416 = vmul.f32 %v1404, 1.442695
        %v1417 = vpow.pop %v1416
        %v1418 = vmul.f32 %v1405, 1.442695
        %v1419 = vpow.pop %v1418
        %v1420 = vmul.f32 %v1406, 1.442695
        %v1421 = vpow.pop %v1420
        %v1422 = vmul.f32 %v1407, 1.442695
        %v1423 = vpow.pop %v1422
        %v1424 = vsel %vm761, %v1409, 0.0
        %1425 = vadd.xlane.f32.xlu0 %v1424
        %v1426 = vpop.xlane.xlu0 %1425
        %v1427 = vsel %vm761, %v1411, 0.0
        %1428 = vadd.xlane.f32.xlu0 %v1427
        %v1429 = vpop.xlane.xlu0 %1428
        %v1430 = vsel %vm761, %v1413, 0.0
        %1431 = vadd.xlane.f32.xlu0 %v1430
        %v1432 = vpop.xlane.xlu0 %1431
        %v1433 = vsel %vm761, %v1415, 0.0
        %1434 = vadd.xlane.f32.xlu0 %v1433
        %v1435 = vpop.xlane.xlu0 %1434
        %v1436 = vsel %vm761, %v1417, 0.0
        %1437 = vadd.xlane.f32.xlu0 %v1436
        %v1438 = vpop.xlane.xlu0 %1437
        %v1439 = vsel %vm761, %v1419, 0.0
        %1440 = vadd.xlane.f32.xlu0 %v1439
        %v1441 = vpop.xlane.xlu0 %1440
        %v1442 = vsel %vm761, %v1421, 0.0
        %1443 = vadd.xlane.f32.xlu0 %v1442
        %v1444 = vpop.xlane.xlu0 %1443
        %v1445 = vsel %vm761, %v1423, 0.0
        %1446 = vadd.xlane.f32.xlu0 %v1445
        %v1447 = vpop.xlane.xlu0 %1446
        %v1448 = vrcp.pop %v1426
        %v1449 = vrcp.pop %v1429
        %v1450 = vrcp.pop %v1432
        %v1451 = vrcp.pop %v1435
        %v1452 = vrcp.pop %v1438
        %v1453 = vrcp.pop %v1441
        %v1454 = vrcp.pop %v1444
        %v1455 = vrcp.pop %v1447
        %v1456 = vmul.f32 %v1409, %v1448
        %v1457 = vmul.f32 %v1411, %v1449
        %v1458 = vmul.f32 %v1413, %v1450
        %v1459 = vmul.f32 %v1415, %v1451
        %v1460 = vmul.f32 %v1417, %v1452
        %v1461 = vmul.f32 %v1419, %v1453
        %v1462 = vmul.f32 %v1421, %v1454
        %v1463 = vmul.f32 %v1423, %v1455
        %1464 = vrot.lane.b32.xlu0 %v737, 64
        %v1465 = vpop.permute.xlu0 %1464
        %v1468 = vsel %vm761, %v1456, 0
        %1470 = vmatprep.subr.mxu0 0.0
        %1471 = vmatpush1.msra.mxu0 %v1465
        %1472 = vmatprep.subr.mxu0 0.0
        %1473 = vmatpush1.msra.mxu0 0.0
        %1474 = vmatprep.subr.mxu0 0.0
        %1475 = vmatpush1.msra.mxu0 0.0
        %1476 = vmatprep.subr.mxu0 0.0
        %1477 = vmatpush1.msra.mxu0 0.0
        %1478 = vmatprep.subr.mxu0 0.0
        %1479 = vmatpush1.msra.mxu0 0.0
        %1480 = vmatprep.subr.mxu0 0.0
        %1481 = vmatpush1.msra.mxu0 0.0
        %1482 = vmatprep.subr.mxu0 0.0
        %1483 = vmatpush1.msra.mxu0 0.0
        %1484 = vmatprep.subr.mxu0 0.0
        %1485 = vmatpush1.msra.mxu0 0.0
        %1486 = vmatprep.subr.mxu0 0.0
        %1487 = vmatpush1.msra.mxu0 0.0
        %1488 = vmatprep.subr.mxu0 0.0
        %1489 = vmatpush1.msra.mxu0 0.0
        %1490 = vmatprep.subr.mxu0 0.0
        %1491 = vmatpush1.msra.mxu0 0.0
        %1492 = vmatprep.subr.mxu0 0.0
        %1493 = vmatpush1.msra.mxu0 0.0
        %1494 = vmatprep.subr.mxu0 0.0
        %1495 = vmatpush1.msra.mxu0 0.0
        %1496 = vmatprep.subr.mxu0 0.0
        %1497 = vmatpush1.msra.mxu0 0.0
        %1498 = vmatprep.subr.mxu0 0.0
        %1499 = vmatpush1.msra.mxu0 0.0
        %1500 = vmatprep.subr.mxu0 0.0
        %1501 = vmatpush1.msra.mxu0 0.0
        %1502 = vmatprep.subr.mxu0 0.0
        %1503 = vmatpush1.msra.mxu0 0.0
        %1504 = vmatprep.subr.mxu0 0.0
        %1505 = vmatpush1.msra.mxu0 0.0
        %1506 = vmatprep.subr.mxu0 0.0
        %1507 = vmatpush1.msra.mxu0 0.0
        %1508 = vmatprep.subr.mxu0 0.0
        %1509 = vmatpush1.msra.mxu0 0.0
        %1510 = vmatprep.subr.mxu0 0.0
        %1511 = vmatpush1.msra.mxu0 0.0
        %1512 = vmatprep.subr.mxu0 0.0
        %1513 = vmatpush1.msra.mxu0 0.0
        %1514 = vmatprep.subr.mxu0 0.0
        %1515 = vmatpush1.msra.mxu0 0.0
        %1516 = vmatprep.subr.mxu0 0.0
        %1517 = vmatpush1.msra.mxu0 0.0
        %1518 = vmatprep.subr.mxu0 0.0
        %1519 = vmatpush1.msra.mxu0 0.0
        %1520 = vmatprep.subr.mxu0 0.0
        %1521 = vmatpush1.msra.mxu0 0.0
        %1522 = vmatprep.subr.mxu0 0.0
        %1523 = vmatpush1.msra.mxu0 0.0
        %1524 = vmatprep.subr.mxu0 0.0
        %1525 = vmatpush1.msra.mxu0 0.0
        %1526 = vmatprep.subr.mxu0 0.0
        %1527 = vmatpush1.msra.mxu0 0.0
        %1528 = vmatprep.subr.mxu0 0.0
        %1529 = vmatpush1.msra.mxu0 0.0
        %1530 = vmatprep.subr.mxu0 0.0
        %1531 = vmatpush1.msra.mxu0 0.0
        %1532 = vmatprep.subr.mxu0 0.0
        %1533 = vmatpush1.msra.mxu0 0.0
        %1534 = vmatprep.mubr.f32.mxu0 0.0
        %1535 = vmatmul.mubr.f32.gmra.mrb[0].mxu0 %v1468
        %v1536 = vpop.f32.mrb[0].mxu0
        %v1537 = vadd.f32 0.0, %v1536
        %v1538 = vpop.f32.mrb[0].mxu0
        %1539 = vdwg.mxu0
        %1540 = vrot.lane.b32.xlu0 %v742, 64
        %v1541 = vpop.permute.xlu0 %1540
        %v1544 = vsel %vm761, %v1457, 0
        %1546 = vmatprep.subr.mxu0 0.0
        %1547 = vmatpush1.msra.mxu0 %v1541
        %1548 = vmatprep.subr.mxu0 0.0
        %1549 = vmatpush1.msra.mxu0 0.0
        %1550 = vmatprep.subr.mxu0 0.0
        %1551 = vmatpush1.msra.mxu0 0.0
        %1552 = vmatprep.subr.mxu0 0.0
        %1553 = vmatpush1.msra.mxu0 0.0
        %1554 = vmatprep.subr.mxu0 0.0
        %1555 = vmatpush1.msra.mxu0 0.0
        %1556 = vmatprep.subr.mxu0 0.0
        %1557 = vmatpush1.msra.mxu0 0.0
        %1558 = vmatprep.subr.mxu0 0.0
        %1559 = vmatpush1.msra.mxu0 0.0
        %1560 = vmatprep.subr.mxu0 0.0
        %1561 = vmatpush1.msra.mxu0 0.0
        %1562 = vmatprep.subr.mxu0 0.0
        %1563 = vmatpush1.msra.mxu0 0.0
        %1564 = vmatprep.subr.mxu0 0.0
        %1565 = vmatpush1.msra.mxu0 0.0
        %1566 = vmatprep.subr.mxu0 0.0
        %1567 = vmatpush1.msra.mxu0 0.0
        %1568 = vmatprep.subr.mxu0 0.0
        %1569 = vmatpush1.msra.mxu0 0.0
        %1570 = vmatprep.subr.mxu0 0.0
        %1571 = vmatpush1.msra.mxu0 0.0
        %1572 = vmatprep.subr.mxu0 0.0
        %1573 = vmatpush1.msra.mxu0 0.0
        %1574 = vmatprep.subr.mxu0 0.0
        %1575 = vmatpush1.msra.mxu0 0.0
        %1576 = vmatprep.subr.mxu0 0.0
        %1577 = vmatpush1.msra.mxu0 0.0
        %1578 = vmatprep.subr.mxu0 0.0
        %1579 = vmatpush1.msra.mxu0 0.0
        %1580 = vmatprep.subr.mxu0 0.0
        %1581 = vmatpush1.msra.mxu0 0.0
        %1582 = vmatprep.subr.mxu0 0.0
        %1583 = vmatpush1.msra.mxu0 0.0
        %1584 = vmatprep.subr.mxu0 0.0
        %1585 = vmatpush1.msra.mxu0 0.0
        %1586 = vmatprep.subr.mxu0 0.0
        %1587 = vmatpush1.msra.mxu0 0.0
        %1588 = vmatprep.subr.mxu0 0.0
        %1589 = vmatpush1.msra.mxu0 0.0
        %1590 = vmatprep.subr.mxu0 0.0
        %1591 = vmatpush1.msra.mxu0 0.0
        %1592 = vmatprep.subr.mxu0 0.0
        %1593 = vmatpush1.msra.mxu0 0.0
        %1594 = vmatprep.subr.mxu0 0.0
        %1595 = vmatpush1.msra.mxu0 0.0
        %1596 = vmatprep.subr.mxu0 0.0
        %1597 = vmatpush1.msra.mxu0 0.0
        %1598 = vmatprep.subr.mxu0 0.0
        %1599 = vmatpush1.msra.mxu0 0.0
        %1600 = vmatprep.subr.mxu0 0.0
        %1601 = vmatpush1.msra.mxu0 0.0
        %1602 = vmatprep.subr.mxu0 0.0
        %1603 = vmatpush1.msra.mxu0 0.0
        %1604 = vmatprep.subr.mxu0 0.0
        %1605 = vmatpush1.msra.mxu0 0.0
        %1606 = vmatprep.subr.mxu0 0.0
        %1607 = vmatpush1.msra.mxu0 0.0
        %1608 = vmatprep.subr.mxu0 0.0
        %1609 = vmatpush1.msra.mxu0 0.0
        %1610 = vmatprep.mubr.f32.mxu0 0.0
        %1611 = vmatmul.mubr.f32.gmra.mrb[0].mxu0 %v1544
        %v1612 = vpop.f32.mrb[0].mxu0
        %v1613 = vadd.f32 0.0, %v1612
        %v1614 = vpop.f32.mrb[0].mxu0
        %1615 = vdwg.mxu0
        %1616 = vrot.lane.b32.xlu0 %v748, 64
        %v1617 = vpop.permute.xlu0 %1616
        %v1620 = vsel %vm761, %v1458, 0
        %1622 = vmatprep.subr.mxu0 0.0
        %1623 = vmatpush1.msra.mxu0 %v1617
        %1624 = vmatprep.subr.mxu0 0.0
        %1625 = vmatpush1.msra.mxu0 0.0
        %1626 = vmatprep.subr.mxu0 0.0
        %1627 = vmatpush1.msra.mxu0 0.0
        %1628 = vmatprep.subr.mxu0 0.0
        %1629 = vmatpush1.msra.mxu0 0.0
        %1630 = vmatprep.subr.mxu0 0.0
        %1631 = vmatpush1.msra.mxu0 0.0
        %1632 = vmatprep.subr.mxu0 0.0
        %1633 = vmatpush1.msra.mxu0 0.0
        %1634 = vmatprep.subr.mxu0 0.0
        %1635 = vmatpush1.msra.mxu0 0.0
        %1636 = vmatprep.subr.mxu0 0.0
        %1637 = vmatpush1.msra.mxu0 0.0
        %1638 = vmatprep.subr.mxu0 0.0
        %1639 = vmatpush1.msra.mxu0 0.0
        %1640 = vmatprep.subr.mxu0 0.0
        %1641 = vmatpush1.msra.mxu0 0.0
        %1642 = vmatprep.subr.mxu0 0.0
        %1643 = vmatpush1.msra.mxu0 0.0
        %1644 = vmatprep.subr.mxu0 0.0
        %1645 = vmatpush1.msra.mxu0 0.0
        %1646 = vmatprep.subr.mxu0 0.0
        %1647 = vmatpush1.msra.mxu0 0.0
        %1648 = vmatprep.subr.mxu0 0.0
        %1649 = vmatpush1.msra.mxu0 0.0
        %1650 = vmatprep.subr.mxu0 0.0
        %1651 = vmatpush1.msra.mxu0 0.0
        %1652 = vmatprep.subr.mxu0 0.0
        %1653 = vmatpush1.msra.mxu0 0.0
        %1654 = vmatprep.subr.mxu0 0.0
        %1655 = vmatpush1.msra.mxu0 0.0
        %1656 = vmatprep.subr.mxu0 0.0
        %1657 = vmatpush1.msra.mxu0 0.0
        %1658 = vmatprep.subr.mxu0 0.0
        %1659 = vmatpush1.msra.mxu0 0.0
        %1660 = vmatprep.subr.mxu0 0.0
        %1661 = vmatpush1.msra.mxu0 0.0
        %1662 = vmatprep.subr.mxu0 0.0
        %1663 = vmatpush1.msra.mxu0 0.0
        %1664 = vmatprep.subr.mxu0 0.0
        %1665 = vmatpush1.msra.mxu0 0.0
        %1666 = vmatprep.subr.mxu0 0.0
        %1667 = vmatpush1.msra.mxu0 0.0
        %1668 = vmatprep.subr.mxu0 0.0
        %1669 = vmatpush1.msra.mxu0 0.0
        %1670 = vmatprep.subr.mxu0 0.0
        %1671 = vmatpush1.msra.mxu0 0.0
        %1672 = vmatprep.subr.mxu0 0.0
        %1673 = vmatpush1.msra.mxu0 0.0
        %1674 = vmatprep.subr.mxu0 0.0
        %1675 = vmatpush1.msra.mxu0 0.0
        %1676 = vmatprep.subr.mxu0 0.0
        %1677 = vmatpush1.msra.mxu0 0.0
        %1678 = vmatprep.subr.mxu0 0.0
        %1679 = vmatpush1.msra.mxu0 0.0
        %1680 = vmatprep.subr.mxu0 0.0
        %1681 = vmatpush1.msra.mxu0 0.0
        %1682 = vmatprep.subr.mxu0 0.0
        %1683 = vmatpush1.msra.mxu0 0.0
        %1684 = vmatprep.subr.mxu0 0.0
        %1685 = vmatpush1.msra.mxu0 0.0
        %1686 = vmatprep.mubr.f32.mxu0 0.0
        %1687 = vmatmul.mubr.f32.gmra.mrb[0].mxu0 %v1620
        %v1688 = vpop.f32.mrb[0].mxu0
        %v1689 = vadd.f32 0.0, %v1688
        %v1690 = vpop.f32.mrb[0].mxu0
        %1691 = vdwg.mxu0
        %1692 = vrot.lane.b32.xlu0 %v750, 64
        %v1693 = vpop.permute.xlu0 %1692
        %v1696 = vsel %vm761, %v1459, 0
        %1698 = vmatprep.subr.mxu0 0.0
        %1699 = vmatpush1.msra.mxu0 %v1693
        %1700 = vmatprep.subr.mxu0 0.0
        %1701 = vmatpush1.msra.mxu0 0.0
        %1702 = vmatprep.subr.mxu0 0.0
        %1703 = vmatpush1.msra.mxu0 0.0
        %1704 = vmatprep.subr.mxu0 0.0
        %1705 = vmatpush1.msra.mxu0 0.0
        %1706 = vmatprep.subr.mxu0 0.0
        %1707 = vmatpush1.msra.mxu0 0.0
        %1708 = vmatprep.subr.mxu0 0.0
        %1709 = vmatpush1.msra.mxu0 0.0
        %1710 = vmatprep.subr.mxu0 0.0
        %1711 = vmatpush1.msra.mxu0 0.0
        %1712 = vmatprep.subr.mxu0 0.0
        %1713 = vmatpush1.msra.mxu0 0.0
        %1714 = vmatprep.subr.mxu0 0.0
        %1715 = vmatpush1.msra.mxu0 0.0
        %1716 = vmatprep.subr.mxu0 0.0
        %1717 = vmatpush1.msra.mxu0 0.0
        %1718 = vmatprep.subr.mxu0 0.0
        %1719 = vmatpush1.msra.mxu0 0.0
        %1720 = vmatprep.subr.mxu0 0.0
        %1721 = vmatpush1.msra.mxu0 0.0
        %1722 = vmatprep.subr.mxu0 0.0
        %1723 = vmatpush1.msra.mxu0 0.0
        %1724 = vmatprep.subr.mxu0 0.0
        %1725 = vmatpush1.msra.mxu0 0.0
        %1726 = vmatprep.subr.mxu0 0.0
        %1727 = vmatpush1.msra.mxu0 0.0
        %1728 = vmatprep.subr.mxu0 0.0
        %1729 = vmatpush1.msra.mxu0 0.0
        %1730 = vmatprep.subr.mxu0 0.0
        %1731 = vmatpush1.msra.mxu0 0.0
        %1732 = vmatprep.subr.mxu0 0.0
        %1733 = vmatpush1.msra.mxu0 0.0
        %1734 = vmatprep.subr.mxu0 0.0
        %1735 = vmatpush1.msra.mxu0 0.0
        %1736 = vmatprep.subr.mxu0 0.0
        %1737 = vmatpush1.msra.mxu0 0.0
        %1738 = vmatprep.subr.mxu0 0.0
        %1739 = vmatpush1.msra.mxu0 0.0
        %1740 = vmatprep.subr.mxu0 0.0
        %1741 = vmatpush1.msra.mxu0 0.0
        %1742 = vmatprep.subr.mxu0 0.0
        %1743 = vmatpush1.msra.mxu0 0.0
        %1744 = vmatprep.subr.mxu0 0.0
        %1745 = vmatpush1.msra.mxu0 0.0
        %1746 = vmatprep.subr.mxu0 0.0
        %1747 = vmatpush1.msra.mxu0 0.0
        %1748 = vmatprep.subr.mxu0 0.0
        %1749 = vmatpush1.msra.mxu0 0.0
        %1750 = vmatprep.subr.mxu0 0.0
        %1751 = vmatpush1.msra.mxu0 0.0
        %1752 = vmatprep.subr.mxu0 0.0
        %1753 = vmatpush1.msra.mxu0 0.0
        %1754 = vmatprep.subr.mxu0 0.0
        %1755 = vmatpush1.msra.mxu0 0.0
        %1756 = vmatprep.subr.mxu0 0.0
        %1757 = vmatpush1.msra.mxu0 0.0
        %1758 = vmatprep.subr.mxu0 0.0
        %1759 = vmatpush1.msra.mxu0 0.0
        %1760 = vmatprep.subr.mxu0 0.0
        %1761 = vmatpush1.msra.mxu0 0.0
        %1762 = vmatprep.mubr.f32.mxu0 0.0
        %1763 = vmatmul.mubr.f32.gmra.mrb[0].mxu0 %v1696
        %v1764 = vpop.f32.mrb[0].mxu0
        %v1765 = vadd.f32 0.0, %v1764
        %v1766 = vpop.f32.mrb[0].mxu0
        %1767 = vdwg.mxu0
        %1768 = vrot.lane.b32.xlu0 %v752, 64
        %v1769 = vpop.permute.xlu0 %1768
        %v1772 = vsel %vm761, %v1460, 0
        %1774 = vmatprep.subr.mxu0 0.0
        %1775 = vmatpush1.msra.mxu0 %v1769
        %1776 = vmatprep.subr.mxu0 0.0
        %1777 = vmatpush1.msra.mxu0 0.0
        %1778 = vmatprep.subr.mxu0 0.0
        %1779 = vmatpush1.msra.mxu0 0.0
        %1780 = vmatprep.subr.mxu0 0.0
        %1781 = vmatpush1.msra.mxu0 0.0
        %1782 = vmatprep.subr.mxu0 0.0
        %1783 = vmatpush1.msra.mxu0 0.0
        %1784 = vmatprep.subr.mxu0 0.0
        %1785 = vmatpush1.msra.mxu0 0.0
        %1786 = vmatprep.subr.mxu0 0.0
        %1787 = vmatpush1.msra.mxu0 0.0
        %1788 = vmatprep.subr.mxu0 0.0
        %1789 = vmatpush1.msra.mxu0 0.0
        %1790 = vmatprep.subr.mxu0 0.0
        %1791 = vmatpush1.msra.mxu0 0.0
        %1792 = vmatprep.subr.mxu0 0.0
        %1793 = vmatpush1.msra.mxu0 0.0
        %1794 = vmatprep.subr.mxu0 0.0
        %1795 = vmatpush1.msra.mxu0 0.0
        %1796 = vmatprep.subr.mxu0 0.0
        %1797 = vmatpush1.msra.mxu0 0.0
        %1798 = vmatprep.subr.mxu0 0.0
        %1799 = vmatpush1.msra.mxu0 0.0
        %1800 = vmatprep.subr.mxu0 0.0
        %1801 = vmatpush1.msra.mxu0 0.0
        %1802 = vmatprep.subr.mxu0 0.0
        %1803 = vmatpush1.msra.mxu0 0.0
        %1804 = vmatprep.subr.mxu0 0.0
        %1805 = vmatpush1.msra.mxu0 0.0
        %1806 = vmatprep.subr.mxu0 0.0
        %1807 = vmatpush1.msra.mxu0 0.0
        %1808 = vmatprep.subr.mxu0 0.0
        %1809 = vmatpush1.msra.mxu0 0.0
        %1810 = vmatprep.subr.mxu0 0.0
        %1811 = vmatpush1.msra.mxu0 0.0
        %1812 = vmatprep.subr.mxu0 0.0
        %1813 = vmatpush1.msra.mxu0 0.0
        %1814 = vmatprep.subr.mxu0 0.0
        %1815 = vmatpush1.msra.mxu0 0.0
        %1816 = vmatprep.subr.mxu0 0.0
        %1817 = vmatpush1.msra.mxu0 0.0
        %1818 = vmatprep.subr.mxu0 0.0
        %1819 = vmatpush1.msra.mxu0 0.0
        %1820 = vmatprep.subr.mxu0 0.0
        %1821 = vmatpush1.msra.mxu0 0.0
        %1822 = vmatprep.subr.mxu0 0.0
        %1823 = vmatpush1.msra.mxu0 0.0
        %1824 = vmatprep.subr.mxu0 0.0
        %1825 = vmatpush1.msra.mxu0 0.0
        %1826 = vmatprep.subr.mxu0 0.0
        %1827 = vmatpush1.msra.mxu0 0.0
        %1828 = vmatprep.subr.mxu0 0.0
        %1829 = vmatpush1.msra.mxu0 0.0
        %1830 = vmatprep.subr.mxu0 0.0
        %1831 = vmatpush1.msra.mxu0 0.0
        %1832 = vmatprep.subr.mxu0 0.0
        %1833 = vmatpush1.msra.mxu0 0.0
        %1834 = vmatprep.subr.mxu0 0.0
        %1835 = vmatpush1.msra.mxu0 0.0
        %1836 = vmatprep.subr.mxu0 0.0
        %1837 = vmatpush1.msra.mxu0 0.0
        %1838 = vmatprep.mubr.f32.mxu0 0.0
        %1839 = vmatmul.mubr.f32.gmra.mrb[0].mxu0 %v1772
        %v1840 = vpop.f32.mrb[0].mxu0
        %v1841 = vadd.f32 0.0, %v1840
        %v1842 = vpop.f32.mrb[0].mxu0
        %1843 = vdwg.mxu0
        %1844 = vrot.lane.b32.xlu0 %v754, 64
        %v1845 = vpop.permute.xlu0 %1844
        %v1848 = vsel %vm761, %v1461, 0
        %1850 = vmatprep.subr.mxu0 0.0
        %1851 = vmatpush1.msra.mxu0 %v1845
        %1852 = vmatprep.subr.mxu0 0.0
        %1853 = vmatpush1.msra.mxu0 0.0
        %1854 = vmatprep.subr.mxu0 0.0
        %1855 = vmatpush1.msra.mxu0 0.0
        %1856 = vmatprep.subr.mxu0 0.0
        %1857 = vmatpush1.msra.mxu0 0.0
        %1858 = vmatprep.subr.mxu0 0.0
        %1859 = vmatpush1.msra.mxu0 0.0
        %1860 = vmatprep.subr.mxu0 0.0
        %1861 = vmatpush1.msra.mxu0 0.0
        %1862 = vmatprep.subr.mxu0 0.0
        %1863 = vmatpush1.msra.mxu0 0.0
        %1864 = vmatprep.subr.mxu0 0.0
        %1865 = vmatpush1.msra.mxu0 0.0
        %1866 = vmatprep.subr.mxu0 0.0
        %1867 = vmatpush1.msra.mxu0 0.0
        %1868 = vmatprep.subr.mxu0 0.0
        %1869 = vmatpush1.msra.mxu0 0.0
        %1870 = vmatprep.subr.mxu0 0.0
        %1871 = vmatpush1.msra.mxu0 0.0
        %1872 = vmatprep.subr.mxu0 0.0
        %1873 = vmatpush1.msra.mxu0 0.0
        %1874 = vmatprep.subr.mxu0 0.0
        %1875 = vmatpush1.msra.mxu0 0.0
        %1876 = vmatprep.subr.mxu0 0.0
        %1877 = vmatpush1.msra.mxu0 0.0
        %1878 = vmatprep.subr.mxu0 0.0
        %1879 = vmatpush1.msra.mxu0 0.0
        %1880 = vmatprep.subr.mxu0 0.0
        %1881 = vmatpush1.msra.mxu0 0.0
        %1882 = vmatprep.subr.mxu0 0.0
        %1883 = vmatpush1.msra.mxu0 0.0
        %1884 = vmatprep.subr.mxu0 0.0
        %1885 = vmatpush1.msra.mxu0 0.0
        %1886 = vmatprep.subr.mxu0 0.0
        %1887 = vmatpush1.msra.mxu0 0.0
        %1888 = vmatprep.subr.mxu0 0.0
        %1889 = vmatpush1.msra.mxu0 0.0
        %1890 = vmatprep.subr.mxu0 0.0
        %1891 = vmatpush1.msra.mxu0 0.0
        %1892 = vmatprep.subr.mxu0 0.0
        %1893 = vmatpush1.msra.mxu0 0.0
        %1894 = vmatprep.subr.mxu0 0.0
        %1895 = vmatpush1.msra.mxu0 0.0
        %1896 = vmatprep.subr.mxu0 0.0
        %1897 = vmatpush1.msra.mxu0 0.0
        %1898 = vmatprep.subr.mxu0 0.0
        %1899 = vmatpush1.msra.mxu0 0.0
        %1900 = vmatprep.subr.mxu0 0.0
        %1901 = vmatpush1.msra.mxu0 0.0
        %1902 = vmatprep.subr.mxu0 0.0
        %1903 = vmatpush1.msra.mxu0 0.0
        %1904 = vmatprep.subr.mxu0 0.0
        %1905 = vmatpush1.msra.mxu0 0.0
        %1906 = vmatprep.subr.mxu0 0.0
        %1907 = vmatpush1.msra.mxu0 0.0
        %1908 = vmatprep.subr.mxu0 0.0
        %1909 = vmatpush1.msra.mxu0 0.0
        %1910 = vmatprep.subr.mxu0 0.0
        %1911 = vmatpush1.msra.mxu0 0.0
        %1912 = vmatprep.subr.mxu0 0.0
        %1913 = vmatpush1.msra.mxu0 0.0
        %1914 = vmatprep.mubr.f32.mxu0 0.0
        %1915 = vmatmul.mubr.f32.gmra.mrb[0].mxu0 %v1848
        %v1916 = vpop.f32.mrb[0].mxu0
        %v1917 = vadd.f32 0.0, %v1916
        %v1918 = vpop.f32.mrb[0].mxu0
        %1919 = vdwg.mxu0
        %1920 = vrot.lane.b32.xlu0 %v756, 64
        %v1921 = vpop.permute.xlu0 %1920
        %v1924 = vsel %vm761, %v1462, 0
        %1926 = vmatprep.subr.mxu0 0.0
        %1927 = vmatpush1.msra.mxu0 %v1921
        %1928 = vmatprep.subr.mxu0 0.0
        %1929 = vmatpush1.msra.mxu0 0.0
        %1930 = vmatprep.subr.mxu0 0.0
        %1931 = vmatpush1.msra.mxu0 0.0
        %1932 = vmatprep.subr.mxu0 0.0
        %1933 = vmatpush1.msra.mxu0 0.0
        %1934 = vmatprep.subr.mxu0 0.0
        %1935 = vmatpush1.msra.mxu0 0.0
        %1936 = vmatprep.subr.mxu0 0.0
        %1937 = vmatpush1.msra.mxu0 0.0
        %1938 = vmatprep.subr.mxu0 0.0
        %1939 = vmatpush1.msra.mxu0 0.0
        %1940 = vmatprep.subr.mxu0 0.0
        %1941 = vmatpush1.msra.mxu0 0.0
        %1942 = vmatprep.subr.mxu0 0.0
        %1943 = vmatpush1.msra.mxu0 0.0
        %1944 = vmatprep.subr.mxu0 0.0
        %1945 = vmatpush1.msra.mxu0 0.0
        %1946 = vmatprep.subr.mxu0 0.0
        %1947 = vmatpush1.msra.mxu0 0.0
        %1948 = vmatprep.subr.mxu0 0.0
        %1949 = vmatpush1.msra.mxu0 0.0
        %1950 = vmatprep.subr.mxu0 0.0
        %1951 = vmatpush1.msra.mxu0 0.0
        %1952 = vmatprep.subr.mxu0 0.0
        %1953 = vmatpush1.msra.mxu0 0.0
        %1954 = vmatprep.subr.mxu0 0.0
        %1955 = vmatpush1.msra.mxu0 0.0
        %1956 = vmatprep.subr.mxu0 0.0
        %1957 = vmatpush1.msra.mxu0 0.0
        %1958 = vmatprep.subr.mxu0 0.0
        %1959 = vmatpush1.msra.mxu0 0.0
        %1960 = vmatprep.subr.mxu0 0.0
        %1961 = vmatpush1.msra.mxu0 0.0
        %1962 = vmatprep.subr.mxu0 0.0
        %1963 = vmatpush1.msra.mxu0 0.0
        %1964 = vmatprep.subr.mxu0 0.0
        %1965 = vmatpush1.msra.mxu0 0.0
        %1966 = vmatprep.subr.mxu0 0.0
        %1967 = vmatpush1.msra.mxu0 0.0
        %1968 = vmatprep.subr.mxu0 0.0
        %1969 = vmatpush1.msra.mxu0 0.0
        %1970 = vmatprep.subr.mxu0 0.0
        %1971 = vmatpush1.msra.mxu0 0.0
        %1972 = vmatprep.subr.mxu0 0.0
        %1973 = vmatpush1.msra.mxu0 0.0
        %1974 = vmatprep.subr.mxu0 0.0
        %1975 = vmatpush1.msra.mxu0 0.0
        %1976 = vmatprep.subr.mxu0 0.0
        %1977 = vmatpush1.msra.mxu0 0.0
        %1978 = vmatprep.subr.mxu0 0.0
        %1979 = vmatpush1.msra.mxu0 0.0
        %1980 = vmatprep.subr.mxu0 0.0
        %1981 = vmatpush1.msra.mxu0 0.0
        %1982 = vmatprep.subr.mxu0 0.0
        %1983 = vmatpush1.msra.mxu0 0.0
        %1984 = vmatprep.subr.mxu0 0.0
        %1985 = vmatpush1.msra.mxu0 0.0
        %1986 = vmatprep.subr.mxu0 0.0
        %1987 = vmatpush1.msra.mxu0 0.0
        %1988 = vmatprep.subr.mxu0 0.0
        %1989 = vmatpush1.msra.mxu0 0.0
        %1990 = vmatprep.mubr.f32.mxu0 0.0
        %1991 = vmatmul.mubr.f32.gmra.mrb[0].mxu0 %v1924
        %v1992 = vpop.f32.mrb[0].mxu0
        %v1993 = vadd.f32 0.0, %v1992
        %v1994 = vpop.f32.mrb[0].mxu0
        %1995 = vdwg.mxu0
        %1996 = vrot.lane.b32.xlu0 %v758, 64
        %v1997 = vpop.permute.xlu0 %1996
        %v2000 = vsel %vm761, %v1463, 0
        %2002 = vmatprep.subr.mxu0 0.0
        %2003 = vmatpush1.msra.mxu0 %v1997
        %2004 = vmatprep.subr.mxu0 0.0
        %2005 = vmatpush1.msra.mxu0 0.0
        %2006 = vmatprep.subr.mxu0 0.0
        %2007 = vmatpush1.msra.mxu0 0.0
        %2008 = vmatprep.subr.mxu0 0.0
        %2009 = vmatpush1.msra.mxu0 0.0
        %2010 = vmatprep.subr.mxu0 0.0
        %2011 = vmatpush1.msra.mxu0 0.0
        %2012 = vmatprep.subr.mxu0 0.0
        %2013 = vmatpush1.msra.mxu0 0.0
        %2014 = vmatprep.subr.mxu0 0.0
        %2015 = vmatpush1.msra.mxu0 0.0
        %2016 = vmatprep.subr.mxu0 0.0
        %2017 = vmatpush1.msra.mxu0 0.0
        %2018 = vmatprep.subr.mxu0 0.0
        %2019 = vmatpush1.msra.mxu0 0.0
        %2020 = vmatprep.subr.mxu0 0.0
        %2021 = vmatpush1.msra.mxu0 0.0
        %2022 = vmatprep.subr.mxu0 0.0
        %2023 = vmatpush1.msra.mxu0 0.0
        %2024 = vmatprep.subr.mxu0 0.0
        %2025 = vmatpush1.msra.mxu0 0.0
        %2026 = vmatprep.subr.mxu0 0.0
        %2027 = vmatpush1.msra.mxu0 0.0
        %2028 = vmatprep.subr.mxu0 0.0
        %2029 = vmatpush1.msra.mxu0 0.0
        %2030 = vmatprep.subr.mxu0 0.0
        %2031 = vmatpush1.msra.mxu0 0.0
        %2032 = vmatprep.subr.mxu0 0.0
        %2033 = vmatpush1.msra.mxu0 0.0
        %2034 = vmatprep.subr.mxu0 0.0
        %2035 = vmatpush1.msra.mxu0 0.0
        %2036 = vmatprep.subr.mxu0 0.0
        %2037 = vmatpush1.msra.mxu0 0.0
        %2038 = vmatprep.subr.mxu0 0.0
        %2039 = vmatpush1.msra.mxu0 0.0
        %2040 = vmatprep.subr.mxu0 0.0
        %2041 = vmatpush1.msra.mxu0 0.0
        %2042 = vmatprep.subr.mxu0 0.0
        %2043 = vmatpush1.msra.mxu0 0.0
        %2044 = vmatprep.subr.mxu0 0.0
        %2045 = vmatpush1.msra.mxu0 0.0
        %2046 = vmatprep.subr.mxu0 0.0
        %2047 = vmatpush1.msra.mxu0 0.0
        %2048 = vmatprep.subr.mxu0 0.0
        %2049 = vmatpush1.msra.mxu0 0.0
        %2050 = vmatprep.subr.mxu0 0.0
        %2051 = vmatpush1.msra.mxu0 0.0
        %2052 = vmatprep.subr.mxu0 0.0
        %2053 = vmatpush1.msra.mxu0 0.0
        %2054 = vmatprep.subr.mxu0 0.0
        %2055 = vmatpush1.msra.mxu0 0.0
        %2056 = vmatprep.subr.mxu0 0.0
        %2057 = vmatpush1.msra.mxu0 0.0
        %2058 = vmatprep.subr.mxu0 0.0
        %2059 = vmatpush1.msra.mxu0 0.0
        %2060 = vmatprep.subr.mxu0 0.0
        %2061 = vmatpush1.msra.mxu0 0.0
        %2062 = vmatprep.subr.mxu0 0.0
        %2063 = vmatpush1.msra.mxu0 0.0
        %2064 = vmatprep.subr.mxu0 0.0
        %2065 = vmatpush1.msra.mxu0 0.0
        %2066 = vmatprep.mubr.f32.mxu0 0.0
        %2067 = vmatmul.mubr.f32.gmra.mrb[0].mxu0 %v2000
        %v2068 = vpop.f32.mrb[0].mxu0
        %v2069 = vadd.f32 0.0, %v2068
        %v2070 = vpop.f32.mrb[0].mxu0
        %2071 = vdwg.mxu0
        %2074 = vrot.lane.b32.xlu0 %v1689, 8
        %v2075 = vpop.permute.xlu0 %2074
        %2076 = vrot.lane.b32.xlu0 %v1765, 8
        %v2077 = vpop.permute.xlu0 %2076
        %2082 = vrot.lane.b32.xlu0 %v1841, 16
        %v2083 = vpop.permute.xlu0 %2082
        %2084 = vrot.lane.b32.xlu0 %v1917, 16
        %v2085 = vpop.permute.xlu0 %2084
        %2090 = vrot.lane.b32.xlu0 %v1993, 24
        %v2091 = vpop.permute.xlu0 %2090
        %2092 = vrot.lane.b32.xlu0 %v2069, 24
        %v2093 = vpop.permute.xlu0 %2092
        %v2096 = vsel %vm761, %v1537, %v2075
        %v2097 = vsel %vm761, %v1613, %v2077
        %vm2098 = vcmask 130048
        %v2099 = vsel %vm2098, %v2096, %v2083
        %v2100 = vsel %vm2098, %v2097, %v2085
        %vm2101 = vcmask 195584
        %v2102 = vsel %vm2101, %v2099, %v2091
        %v2103 = vsel %vm2101, %v2100, %v2093
        %v2104 = vld [vmem:[%s608] sm:$0xff]
        %v2105 = vld [vmem:[%s608 + $0x8] sm:$0xff]
        %v2106 = vld [vmem:[%s608 + $0x10] sm:$0xff]
        %v2107 = vld [vmem:[%s608 + $0x18] sm:$0xff]
        %v2108 = vld [vmem:[%s611] sm:$0x1]
        %v2110 = vlaneseq
        %v2111 = vshrl.u32 %v2110, 7
        %v2112 = vsub.s32 0, %v2111
        %v2113 = vrot.slane %v2108, %v2112
        %v2116 = vsel %vm663, %v2102, 0
        %v2119 = vsel %vm663, %v2103, 0
        %2121 = vmatprep.subr.mxu0 0.0
        %2122 = vmatpush1.msra.mxu0 %v2104
        %2123 = vmatprep.subr.mxu0 0.0
        %2124 = vmatpush1.msra.mxu0 %v2105
        %2125 = vmatprep.subr.mxu0 0.0
        %2126 = vmatpush1.msra.mxu0 %v2106
        %2127 = vmatprep.subr.mxu0 0.0
        %2128 = vmatpush1.msra.mxu0 %v2107
        %2129 = vmatprep.subr.mxu0 0.0
        %2130 = vmatpush1.msra.mxu0 0.0
        %2131 = vmatprep.subr.mxu0 0.0
        %2132 = vmatpush1.msra.mxu0 0.0
        %2133 = vmatprep.subr.mxu0 0.0
        %2134 = vmatpush1.msra.mxu0 0.0
        %2135 = vmatprep.subr.mxu0 0.0
        %2136 = vmatpush1.msra.mxu0 0.0
        %2137 = vmatprep.subr.mxu0 0.0
        %2138 = vmatpush1.msra.mxu0 0.0
        %2139 = vmatprep.subr.mxu0 0.0
        %2140 = vmatpush1.msra.mxu0 0.0
        %2141 = vmatprep.subr.mxu0 0.0
        %2142 = vmatpush1.msra.mxu0 0.0
        %2143 = vmatprep.subr.mxu0 0.0
        %2144 = vmatpush1.msra.mxu0 0.0
        %2145 = vmatprep.subr.mxu0 0.0
        %2146 = vmatpush1.msra.mxu0 0.0
        %2147 = vmatprep.subr.mxu0 0.0
        %2148 = vmatpush1.msra.mxu0 0.0
        %2149 = vmatprep.subr.mxu0 0.0
        %2150 = vmatpush1.msra.mxu0 0.0
        %2151 = vmatprep.subr.mxu0 0.0
        %2152 = vmatpush1.msra.mxu0 0.0
        %2153 = vmatprep.subr.mxu0 0.0
        %2154 = vmatpush1.msra.mxu0 0.0
        %2155 = vmatprep.subr.mxu0 0.0
        %2156 = vmatpush1.msra.mxu0 0.0
        %2157 = vmatprep.subr.mxu0 0.0
        %2158 = vmatpush1.msra.mxu0 0.0
        %2159 = vmatprep.subr.mxu0 0.0
        %2160 = vmatpush1.msra.mxu0 0.0
        %2161 = vmatprep.subr.mxu0 0.0
        %2162 = vmatpush1.msra.mxu0 0.0
        %2163 = vmatprep.subr.mxu0 0.0
        %2164 = vmatpush1.msra.mxu0 0.0
        %2165 = vmatprep.subr.mxu0 0.0
        %2166 = vmatpush1.msra.mxu0 0.0
        %2167 = vmatprep.subr.mxu0 0.0
        %2168 = vmatpush1.msra.mxu0 0.0
        %2169 = vmatprep.subr.mxu0 0.0
        %2170 = vmatpush1.msra.mxu0 0.0
        %2171 = vmatprep.subr.mxu0 0.0
        %2172 = vmatpush1.msra.mxu0 0.0
        %2173 = vmatprep.subr.mxu0 0.0
        %2174 = vmatpush1.msra.mxu0 0.0
        %2175 = vmatprep.subr.mxu0 0.0
        %2176 = vmatpush1.msra.mxu0 0.0
        %2177 = vmatprep.subr.mxu0 0.0
        %2178 = vmatpush1.msra.mxu0 0.0
        %2179 = vmatprep.subr.mxu0 0.0
        %2180 = vmatpush1.msra.mxu0 0.0
        %2181 = vmatprep.subr.mxu0 0.0
        %2182 = vmatpush1.msra.mxu0 0.0
        %2183 = vmatprep.subr.mxu0 0.0
        %2184 = vmatpush1.msra.mxu0 0.0
        %2185 = vmatprep.mubr.f32.mxu0 0.0
        %2186 = vmatmul.mubr.f32.gmra.mrb[0].mxu0 %v2116
        %v2187 = vpop.f32.mrb[0].mxu0
        %v2188 = vadd.f32 %v2113, %v2187
        %v2189 = vpop.f32.mrb[0].mxu0
        %2190 = vmatprep.mubr.f32.mxu0 0.0
        %2191 = vmatmul.mubr.f32.gmra.mrb[0].mxu0 %v2119
        %v2192 = vpop.f32.mrb[0].mxu0
        %v2193 = vadd.f32 %v2113, %v2192
        %v2194 = vpop.f32.mrb[0].mxu0
        %2195 = vdwg.mxu0
        %v2196 = vadd.f32 %v650, %v2188
        %v2197 = vadd.f32 %v651, %v2193
        %v2198 = vld [vmem:[%s614] sm:$0x1]
        %v2199 = vld [vmem:[%s617] sm:$0x1]
        %v2200 = vsel %vm663, %v2196, 0.0
        %2201 = vadd.xlane.f32.xlu0 %v2200
        %v2202 = vpop.xlane.xlu0 %2201
        %v2203 = vsel %vm663, %v2197, 0.0
        %2204 = vadd.xlane.f32.xlu0 %v2203
        %v2205 = vpop.xlane.xlu0 %2204
        %v2206 = vrcp.pop 32.0
        %v2207 = vmul.f32 %v2202, %v2206
        %v2208 = vmul.f32 %v2205, %v2206
        %v2209 = vsub.f32 %v2196, %v2207
        %v2210 = vsub.f32 %v2197, %v2208
        %v2211 = vmul.f32 %v2209, %v2209
        %v2212 = vmul.f32 %v2210, %v2210
        %v2213 = vsel %vm663, %v2211, 0.0
        %2214 = vadd.xlane.f32.xlu0 %v2213
        %v2215 = vpop.xlane.xlu0 %2214
        %v2216 = vsel %vm663, %v2212, 0.0
        %2217 = vadd.xlane.f32.xlu0 %v2216
        %v2218 = vpop.xlane.xlu0 %2217
        %v2219 = vmul.f32 %v2215, %v2206
        %v2220 = vmul.f32 %v2218, %v2206
        %v2221 = vadd.f32 %v2219, 1e-05
        %v2222 = vadd.f32 %v2220, 1e-05
        %v2223 = vrsqrt.pop %v2221
        %v2224 = vrsqrt.pop %v2222
        %v2225 = vmul.f32 %v2209, %v2223
        %v2226 = vmul.f32 %v2210, %v2224
        %v2228 = vlaneseq
        %v2229 = vshrl.u32 %v2228, 7
        %v2230 = vsub.s32 0, %v2229
        %v2231 = vrot.slane %v2198, %v2230
        %v2233 = vmul.f32 %v2225, %v2231
        %v2234 = vmul.f32 %v2226, %v2231
        %v2236 = vlaneseq
        %v2237 = vshrl.u32 %v2236, 7
        %v2238 = vsub.s32 0, %v2237
        %v2239 = vrot.slane %v2199, %v2238
        %v2241 = vadd.f32 %v2233, %v2239
        %v2242 = vadd.f32 %v2234, %v2239
        %v2243 = vld [vmem:[%s622] sm:$0xff]
        %v2244 = vld [vmem:[%s622 + $0x8] sm:$0xff]
        %v2245 = vld [vmem:[%s622 + $0x10] sm:$0xff]
        %v2246 = vld [vmem:[%s622 + $0x18] sm:$0xff]
        %v2247 = vld [vmem:[%s625] sm:$0x1]
        %v2249 = vlaneseq
        %v2250 = vshrl.u32 %v2249, 7
        %v2251 = vsub.s32 0, %v2250
        %v2252 = vrot.slane %v2247, %v2251
        %v2255 = vsel %vm663, %v2241, 0
        %v2258 = vsel %vm663, %v2242, 0
        %2260 = vmatprep.subr.mxu0 0.0
        %2261 = vmatpush1.msra.mxu0 %v2243
        %2262 = vmatprep.subr.mxu0 0.0
        %2263 = vmatpush1.msra.mxu0 %v2244
        %2264 = vmatprep.subr.mxu0 0.0
        %2265 = vmatpush1.msra.mxu0 %v2245
        %2266 = vmatprep.subr.mxu0 0.0
        %2267 = vmatpush1.msra.mxu0 %v2246
        %2268 = vmatprep.subr.mxu0 0.0
        %2269 = vmatpush1.msra.mxu0 0.0
        %2270 = vmatprep.subr.mxu0 0.0
        %2271 = vmatpush1.msra.mxu0 0.0
        %2272 = vmatprep.subr.mxu0 0.0
        %2273 = vmatpush1.msra.mxu0 0.0
        %2274 = vmatprep.subr.mxu0 0.0
        %2275 = vmatpush1.msra.mxu0 0.0
        %2276 = vmatprep.subr.mxu0 0.0
        %2277 = vmatpush1.msra.mxu0 0.0
        %2278 = vmatprep.subr.mxu0 0.0
        %2279 = vmatpush1.msra.mxu0 0.0
        %2280 = vmatprep.subr.mxu0 0.0
        %2281 = vmatpush1.msra.mxu0 0.0
        %2282 = vmatprep.subr.mxu0 0.0
        %2283 = vmatpush1.msra.mxu0 0.0
        %2284 = vmatprep.subr.mxu0 0.0
        %2285 = vmatpush1.msra.mxu0 0.0
        %2286 = vmatprep.subr.mxu0 0.0
        %2287 = vmatpush1.msra.mxu0 0.0
        %2288 = vmatprep.subr.mxu0 0.0
        %2289 = vmatpush1.msra.mxu0 0.0
        %2290 = vmatprep.subr.mxu0 0.0
        %2291 = vmatpush1.msra.mxu0 0.0
        %2292 = vmatprep.subr.mxu0 0.0
        %2293 = vmatpush1.msra.mxu0 0.0
        %2294 = vmatprep.subr.mxu0 0.0
        %2295 = vmatpush1.msra.mxu0 0.0
        %2296 = vmatprep.subr.mxu0 0.0
        %2297 = vmatpush1.msra.mxu0 0.0
        %2298 = vmatprep.subr.mxu0 0.0
        %2299 = vmatpush1.msra.mxu0 0.0
        %2300 = vmatprep.subr.mxu0 0.0
        %2301 = vmatpush1.msra.mxu0 0.0
        %2302 = vmatprep.subr.mxu0 0.0
        %2303 = vmatpush1.msra.mxu0 0.0
        %2304 = vmatprep.subr.mxu0 0.0
        %2305 = vmatpush1.msra.mxu0 0.0
        %2306 = vmatprep.subr.mxu0 0.0
        %2307 = vmatpush1.msra.mxu0 0.0
        %2308 = vmatprep.subr.mxu0 0.0
        %2309 = vmatpush1.msra.mxu0 0.0
        %2310 = vmatprep.subr.mxu0 0.0
        %2311 = vmatpush1.msra.mxu0 0.0
        %2312 = vmatprep.subr.mxu0 0.0
        %2313 = vmatpush1.msra.mxu0 0.0
        %2314 = vmatprep.subr.mxu0 0.0
        %2315 = vmatpush1.msra.mxu0 0.0
        %2316 = vmatprep.subr.mxu0 0.0
        %2317 = vmatpush1.msra.mxu0 0.0
        %2318 = vmatprep.subr.mxu0 0.0
        %2319 = vmatpush1.msra.mxu0 0.0
        %2320 = vmatprep.subr.mxu0 0.0
        %2321 = vmatpush1.msra.mxu0 0.0
        %2322 = vmatprep.subr.mxu0 0.0
        %2323 = vmatpush1.msra.mxu0 0.0
        %2324 = vmatprep.mubr.f32.mxu0 0.0
        %2325 = vmatmul.mubr.f32.gmra.mrb[0].mxu0 %v2255
        %v2326 = vpop.f32.mrb[0].mxu0
        %v2327 = vadd.f32 %v2252, %v2326
        %v2328 = vpop.f32.mrb[0].mxu0
        %2329 = vmatprep.mubr.f32.mxu0 0.0
        %2330 = vmatmul.mubr.f32.gmra.mrb[0].mxu0 %v2258
        %v2331 = vpop.f32.mrb[0].mxu0
        %v2332 = vadd.f32 %v2252, %v2331
        %v2333 = vpop.f32.mrb[0].mxu0
        %2334 = vdwg.mxu0
        %v2335 = vmul.f32 %v2327, 0.5
        %v2336 = vmul.f32 %v2332, 0.5
        %v2337 = vmul.f32 %v2327, 0.044715
        %v2338 = vmul.f32 %v2332, 0.044715
        %v2339 = vmul.f32 %v2337, %v2327
        %v2340 = vmul.f32 %v2338, %v2332
        %v2341 = vmul.f32 %v2339, %v2327
        %v2342 = vmul.f32 %v2340, %v2332
        %v2343 = vadd.f32 %v2327, %v2341
        %v2344 = vadd.f32 %v2332, %v2342
        %v2345 = vmul.f32 %v2343, 0.7978846
        %v2346 = vmul.f32 %v2344, 0.7978846
        %v2347 = vtanh.pop %v2345
        %v2348 = vtanh.pop %v2346
        %v2349 = vadd.f32 %v2347, 1.0
        %v2350 = vadd.f32 %v2348, 1.0
        %v2351 = vmul.f32 %v2335, %v2349
        %v2352 = vmul.f32 %v2336, %v2350
        %v2353 = vld [vmem:[%s630] sm:$0xff]
        %v2354 = vld [vmem:[%s630 + $0x8] sm:$0xff]
        %v2355 = vld [vmem:[%s630 + $0x10] sm:$0xff]
        %v2356 = vld [vmem:[%s630 + $0x18] sm:$0xff]
        %v2357 = vld [vmem:[%s630 + $0x20] sm:$0xff]
        %v2358 = vld [vmem:[%s630 + $0x28] sm:$0xff]
        %v2359 = vld [vmem:[%s630 + $0x30] sm:$0xff]
        %v2360 = vld [vmem:[%s630 + $0x38] sm:$0xff]
        %v2361 = vld [vmem:[%s633] sm:$0x1]
        %v2363 = vlaneseq
        %v2364 = vshrl.u32 %v2363, 7
        %v2365 = vsub.s32 0, %v2364
        %v2366 = vrot.slane %v2361, %v2365
        %vm2368 = vcmask 523264
        %v2370 = vsel %vm2368, %v2351, 0
        %v2373 = vsel %vm2368, %v2352, 0
        %2375 = vmatprep.subr.mxu0 0.0
        %2376 = vmatpush1.msra.mxu0 %v2353
        %2377 = vmatprep.subr.mxu0 0.0
        %2378 = vmatpush1.msra.mxu0 %v2354
        %2379 = vmatprep.subr.mxu0 0.0
        %2380 = vmatpush1.msra.mxu0 %v2355
        %2381 = vmatprep.subr.mxu0 0.0
        %2382 = vmatpush1.msra.mxu0 %v2356
        %2383 = vmatprep.subr.mxu0 0.0
        %2384 = vmatpush1.msra.mxu0 %v2357
        %2385 = vmatprep.subr.mxu0 0.0
        %2386 = vmatpush1.msra.mxu0 %v2358
        %2387 = vmatprep.subr.mxu0 0.0
        %2388 = vmatpush1.msra.mxu0 %v2359
        %2389 = vmatprep.subr.mxu0 0.0
        %2390 = vmatpush1.msra.mxu0 %v2360
        %2391 = vmatprep.subr.mxu0 0.0
        %2392 = vmatpush1.msra.mxu0 0.0
        %2393 = vmatprep.subr.mxu0 0.0
        %2394 = vmatpush1.msra.mxu0 0.0
        %2395 = vmatprep.subr.mxu0 0.0
        %2396 = vmatpush1.msra.mxu0 0.0
        %2397 = vmatprep.subr.mxu0 0.0
        %2398 = vmatpush1.msra.mxu0 0.0
        %2399 = vmatprep.subr.mxu0 0.0
        %2400 = vmatpush1.msra.mxu0 0.0
        %2401 = vmatprep.subr.mxu0 0.0
        %2402 = vmatpush1.msra.mxu0 0.0
        %2403 = vmatprep.subr.mxu0 0.0
        %2404 = vmatpush1.msra.mxu0 0.0
        %2405 = vmatprep.subr.mxu0 0.0
        %2406 = vmatpush1.msra.mxu0 0.0
        %2407 = vmatprep.subr.mxu0 0.0
        %2408 = vmatpush1.msra.mxu0 0.0
        %2409 = vmatprep.subr.mxu0 0.0
        %2410 = vmatpush1.msra.mxu0 0.0
        %2411 = vmatprep.subr.mxu0 0.0
        %2412 = vmatpush1.msra.mxu0 0.0
        %2413 = vmatprep.subr.mxu0 0.0
        %2414 = vmatpush1.msra.mxu0 0.0
        %2415 = vmatprep.subr.mxu0 0.0
        %2416 = vmatpush1.msra.mxu0 0.0
        %2417 = vmatprep.subr.mxu0 0.0
        %2418 = vmatpush1.msra.mxu0 0.0
        %2419 = vmatprep.subr.mxu0 0.0
        %2420 = vmatpush1.msra.mxu0 0.0
        %2421 = vmatprep.subr.mxu0 0.0
        %2422 = vmatpush1.msra.mxu0 0.0
        %2423 = vmatprep.subr.mxu0 0.0
        %2424 = vmatpush1.msra.mxu0 0.0
        %2425 = vmatprep.subr.mxu0 0.0
        %2426 = vmatpush1.msra.mxu0 0.0
        %2427 = vmatprep.subr.mxu0 0.0
        %2428 = vmatpush1.msra.mxu0 0.0
        %2429 = vmatprep.subr.mxu0 0.0
        %2430 = vmatpush1.msra.mxu0 0.0
        %2431 = vmatprep.subr.mxu0 0.0
        %2432 = vmatpush1.msra.mxu0 0.0
        %2433 = vmatprep.subr.mxu0 0.0
        %2434 = vmatpush1.msra.mxu0 0.0
        %2435 = vmatprep.subr.mxu0 0.0
        %2436 = vmatpush1.msra.mxu0 0.0
        %2437 = vmatprep.subr.mxu0 0.0
        %2438 = vmatpush1.msra.mxu0 0.0
        %2439 = vmatprep.mubr.f32.mxu0 0.0
        %2440 = vmatmul.mubr.f32.gmra.mrb[0].mxu0 %v2370
        %v2441 = vpop.f32.mrb[0].mxu0
        %v2442 = vadd.f32 %v2366, %v2441
        %v2443 = vpop.f32.mrb[0].mxu0
        %2444 = vmatprep.mubr.f32.mxu0 0.0
        %2445 = vmatmul.mubr.f32.gmra.mrb[0].mxu0 %v2373
        %v2446 = vpop.f32.mrb[0].mxu0
        %v2447 = vadd.f32 %v2366, %v2446
        %v2448 = vpop.f32.mrb[0].mxu0
        %2449 = vdwg.mxu0
        %v2450 = vadd.f32 %v2241, %v2442
        %v2451 = vadd.f32 %v2242, %v2447
        %v2452 = vld [vmem:[%s636] sm:$0x1]
        %v2453 = vld [vmem:[%s639] sm:$0x1]
        %v2454 = vsel %vm663, %v2450, 0.0
        %2455 = vadd.xlane.f32.xlu0 %v2454
        %v2456 = vpop.xlane.xlu0 %2455
        %v2457 = vsel %vm663, %v2451, 0.0
        %2458 = vadd.xlane.f32.xlu0 %v2457
        %v2459 = vpop.xlane.xlu0 %2458
        %v2460 = vmul.f32 %v2456, %v2206
        %v2461 = vmul.f32 %v2459, %v2206
        %v2462 = vsub.f32 %v2450, %v2460
        %v2463 = vsub.f32 %v2451, %v2461
        %v2464 = vmul.f32 %v2462, %v2462
        %v2465 = vmul.f32 %v2463, %v2463
        %v2466 = vsel %vm663, %v2464, 0.0
        %2467 = vadd.xlane.f32.xlu0 %v2466
        %v2468 = vpop.xlane.xlu0 %2467
        %v2469 = vsel %vm663, %v2465, 0.0
        %2470 = vadd.xlane.f32.xlu0 %v2469
        %v2471 = vpop.xlane.xlu0 %2470
        %v2472 = vmul.f32 %v2468, %v2206
        %v2473 = vmul.f32 %v2471, %v2206
        %v2474 = vadd.f32 %v2472, 1e-05
        %v2475 = vadd.f32 %v2473, 1e-05
        %v2476 = vrsqrt.pop %v2474
        %v2477 = vrsqrt.pop %v2475
        %v2478 = vmul.f32 %v2462, %v2476
        %v2479 = vmul.f32 %v2463, %v2477
        %v2481 = vlaneseq
        %v2482 = vshrl.u32 %v2481, 7
        %v2483 = vsub.s32 0, %v2482
        %v2484 = vrot.slane %v2452, %v2483
        %v2486 = vmul.f32 %v2478, %v2484
        %v2487 = vmul.f32 %v2479, %v2484
        %v2489 = vlaneseq
        %v2490 = vshrl.u32 %v2489, 7
        %v2491 = vsub.s32 0, %v2490
        %v2492 = vrot.slane %v2453, %v2491
        %v2494 = vadd.f32 %v2486, %v2492
        %v2495 = vadd.f32 %v2487, %v2492
        %2496 = vst.msk [vmem:[#allocation5] sm:$0xff] %vm663, %v2494
        %2497 = vst.msk [vmem:[#allocation5 + $0x8] sm:$0xff] %vm663, %v2495
        // Predicated region
        $region81: #{tpu_custom_call.1} parent=71 // pred_check
          %p2498 = pneg %p394
        $region82: #{tpu_custom_call.1} parent=71 // pred_check_branch
          %2500 = sbr.rel (%p2498) target = $region84
        $region83: #{tpu_custom_call.1} parent=71 // pred_region
          %s2501 = smul.u32 2, %s30
          %s2503 = ssub.s32 256, 256
          %2504 = vsyncadd [#allocation4], %s2503
          %s2505 = smul.addr %s2501, 128
          %s2506 = scalar_lea.hbm %s13, %s2505
          %s2507 = sshll.u32 [#allocation5], 4
          %s2508 = int_to_ptr.vmem [resolvable:$true] %s2507
          %2513 = dma.vmem_to_hbm [thread:$0]  %s2508, 256, %s2506, [#allocation4], 128, 128, 8
        $region84: #{tpu_custom_call.1} parent=71 // pred_fallthru
          _
        // Predicated region
        $region85: #{tpu_custom_call.1} parent=71 // pred_check
          %p2514 = pneg %p394
        $region86: #{tpu_custom_call.1} parent=71 // pred_check_branch
          %2516 = sbr.rel (%p2514) target = $region88
        $region87: #{tpu_custom_call.1} parent=71 // pred_region
          %2517 = dma.done [#allocation4], 256
        $region88: #{tpu_custom_call.1} parent=71 // pred_fallthru
          _
      $region72: #{tpu_custom_call.1} parent=5 // pred_fallthru
        _
      %p2518 = scmp.le.s32.totalorder 2, %s21
      // Predicated region
      $region89: #{tpu_custom_call.1} parent=5 // pred_check
        %p2519 = pneg %p2518
      $region90: #{tpu_custom_call.1} parent=5 // pred_check_branch
        %2521 = sbr.rel (%p2519) target = $region92
      $region91: #{tpu_custom_call.1} parent=5 // pred_region
        %s2522 = ssub.s32 %s21, 2
      $region92: #{tpu_custom_call.1} parent=5 // pred_fallthru
        _
    $region6: #{tpu_custom_call.1} parent=1 // loop_footer
      %s25 = sadd.s32 1, %s21
    $region7: #{tpu_custom_call.1} parent=1 // loop_footer_branch
      %20 = sbr.rel target = $region3
    $region8: #{tpu_custom_call.1} parent=1 // loop_exit
      _
    %2523 = vsyncpa [#allocation3], 1
    %s2524 = scalar_lea.sflag [#allocation3], 1
    %2525 = vsyncpa %s2524, 1
    %2526 = vsyncpa [#allocation4], 1
    %s2527 = scalar_lea.sflag [#allocation4], 1
    %2528 = vsyncpa %s2527, 1

</llo_original>
